<compile_context>
chip_gen: v7x
topology: tpu7x:2x2x1
jax: 0.10.0
libtpu: 0.0.40
codegen_flags: <defaults>
</compile_context>

<pallas_src>
import jax
import jax.numpy as jnp
import numpy as np
from jax import lax
from jax.experimental import pallas as pl
from jax.experimental.pallas import tpu as pltpu


def _up_kernel(x_ref, w_ref, o_ref):
    # x_ref: (1, H, W, Cin)      un-padded, pre-ReLU input (NHWC), f32
    # w_ref: (2, 6*Cin, 2*Cout)  bf16 folded weights, one matrix per row-parity
    #                            py; rows ordered (dy, cs, cin), cols (px, cout)
    # o_ref: (1, H, W, 4*Cout)   f32 packed output, channels ordered (py, px, c)
    H, W, Cin = x_ref.shape[1], x_ref.shape[2], x_ref.shape[3]
    Cout = w_ref.shape[2] // 2

    # ReLU, then zero-pad by 1 in both spatial dims (in-kernel, no HBM copy).
    # Keep f32 for the layout-heavy slicing; cast to bf16 only at the matmul.
    xr = jnp.maximum(x_ref[0], 0.0)                            # (H, W, Cin)
    zrow = jnp.zeros((1, W, Cin), jnp.float32)
    xp = jnp.concatenate([zrow, xr, zrow], axis=0)             # (H+2, W, Cin)
    zcol = jnp.zeros((H + 2, 1, Cin), jnp.float32)
    xp = jnp.concatenate([zcol, xp, zcol], axis=1)             # (H+2, W+2, Cin)

    # 9 distinct shifted patches (row shift r, col shift cs in 0..2), each
    # flattened to an (H*W, Cin) im2col column block (built once, reused).
    patch = {}
    for r in range(3):
        for cs in range(3):
            patch[(r, cs)] = xp[r:r + H, cs:cs + W, :].reshape(H * W, Cin)

    # One matmul per output-row parity py: LHS (H*W, 6*Cin) @ RHS (6*Cin, 2*Cout).
    res = []
    for py in range(2):
        lhs = jnp.concatenate(
            [patch[(py + dy, cs)] for dy in range(2) for cs in range(3)],
            axis=-1)                                           # (H*W, 6*Cin)
        res.append(jnp.dot(lhs.astype(jnp.bfloat16), w_ref[py],
                           preferred_element_type=jnp.float32))
    y = jnp.concatenate(res, axis=-1)                          # (H*W, 4*Cout)
    # Column order is (py, px, cout).  ConvTranspose bias is intentionally
    # omitted: InstanceNorm(affine=False) cancels any per-channel constant.

    # InstanceNorm2d (affine=False, eps=1e-5): per-channel stats over the full
    # 2H x 2W output (= all 4 parity column blocks) of this batch element.
    inv_n = jnp.float32(1.0 / (4 * H * W))
    s1 = jnp.sum(y, axis=0, keepdims=True)                     # (1, 4*Cout)
    s2 = jnp.sum(y * y, axis=0, keepdims=True)
    s1c = (s1[:, 0:Cout] + s1[:, Cout:2 * Cout]
           + s1[:, 2 * Cout:3 * Cout] + s1[:, 3 * Cout:4 * Cout])
    s2c = (s2[:, 0:Cout] + s2[:, Cout:2 * Cout]
           + s2[:, 2 * Cout:3 * Cout] + s2[:, 3 * Cout:4 * Cout])
    mean = s1c * inv_n
    var = s2c * inv_n - mean * mean
    inv = lax.rsqrt(var + 1e-5)
    mean4 = jnp.concatenate([mean, mean, mean, mean], axis=-1)  # (1, 4*Cout)
    inv4 = jnp.concatenate([inv, inv, inv, inv], axis=-1)

    o_ref[0] = ((y - mean4) * inv4).reshape(H, W, 4 * Cout).astype(o_ref.dtype)


def up_forward(x1, x2, weight, bias, concat=True):
    """Forward pass of `up` (default / 'innermost' position).

    x1, x2: NCHW float32. weight: (in_ch, out_ch, 4, 4) ConvTranspose2d layout.
    bias: (out_ch,) -- dropped (exactly cancelled by InstanceNorm, affine=False).
    Returns NCHW output of shape (N, out_ch, 2H, 2W).
    """
    x = jnp.concatenate([x2, x1], axis=1) if concat else x1
    N, Cin, H, W = x.shape
    Cout = weight.shape[1]
    del bias  # no-op under InstanceNorm(affine=False)

    # NCHW -> NHWC for the kernel.
    x_nhwc = jnp.transpose(x, (0, 2, 3, 1))

    # Fold the transposed conv into two (6*Cin, 2*Cout) matrices, one per
    # output-row parity py.  For output parity (py, px) and tap (dy, dx) the
    # contributing kernel tap index is k = 3 - parity - 2*tap; the im2col LHS
    # block (dy, cs) corresponds to dx = cs - px (valid only for dx in {0, 1}).
    k_idx = [[3, 1], [2, 0]]                                   # [parity][tap]
    wt = jnp.transpose(weight, (2, 3, 0, 1))                   # (4, 4, Cin, Cout)
    zero_blk = jnp.zeros((Cin, Cout), weight.dtype)
    per_py = []
    for py in range(2):
        rows = []
        for dy in range(2):
            for cs in range(3):
                cols = []
                for px in range(2):
                    dx = cs - px
                    cols.append(wt[k_idx[py][dy], k_idx[px][dx]]
                                if 0 <= dx <= 1 else zero_blk)
                rows.append(jnp.concatenate(cols, axis=1))     # (Cin, 2*Cout)
        per_py.append(jnp.concatenate(rows, axis=0))           # (6*Cin, 2*Cout)
    wfold = jnp.stack(per_py, axis=0).astype(jnp.bfloat16)     # (2, 6*Cin, 2*Cout)

    blk_bytes = (H * W * Cin * 4                 # input block (f32)
                 + 2 * 6 * Cin * 2 * Cout * 2    # folded weights (bf16)
                 + H * W * 4 * Cout * 4)         # output block (f32)
    vmem_limit = int(min(max(2 * blk_bytes + (8 << 20), 32 << 20), 64 << 20))

    out_packed = pl.pallas_call(
        _up_kernel,
        out_shape=jax.ShapeDtypeStruct((N, H, W, 4 * Cout), jnp.float32),
        grid_spec=pltpu.PrefetchScalarGridSpec(
            num_scalar_prefetch=0,
            grid=(N,),
            in_specs=[
                pl.BlockSpec((1, H, W, Cin), lambda n: (n, 0, 0, 0)),
                pl.BlockSpec((2, 6 * Cin, 2 * Cout), lambda n: (0, 0, 0)),
            ],
            out_specs=pl.BlockSpec((1, H, W, 4 * Cout),
                                   lambda n: (n, 0, 0, 0)),
        ),
        compiler_params=pltpu.CompilerParams(
            dimension_semantics=("parallel",),
            vmem_limit_bytes=vmem_limit),
    )(x_nhwc, wfold)

    # TODO(synk): for very large H*W (full-resolution UNet on v7x) add a spatial
    # row-tile grid axis with a 2-row halo and stream the InstanceNorm stats
    # (accumulate s1/s2 across tiles, normalize in a second pass).

    # Unpack (py, px) from the packed channel axis.  This reshape/transpose
    # chain fuses with the mandatory NHWC->NCHW conversion in XLA.
    out = out_packed.reshape(N, H, W, 2, 2, Cout)
    out = jnp.transpose(out, (0, 1, 3, 2, 4, 5)).reshape(N, 2 * H, 2 * W, Cout)
    return jnp.transpose(out, (0, 3, 1, 2))


def up_reference(x1, x2, weight, bias, concat=True):
    """Pure-JAX reference matching PyTorch semantics (for verification)."""
    x = jnp.concatenate([x2, x1], axis=1) if concat else x1
    x = jnp.maximum(x, 0.0)
    # ConvTranspose2d(k=4, s=2, p=1) == dilate input by 2, pad by k-1-p=2,
    # correlate with spatially flipped kernel with in/out channels swapped.
    w_oihw = jnp.transpose(weight, (1, 0, 2, 3))[:, :, ::-1, ::-1]
    y = lax.conv_general_dilated(
        x, w_oihw, window_strides=(1, 1), padding=((2, 2), (2, 2)),
        lhs_dilation=(2, 2), rhs_dilation=(1, 1),
        dimension_numbers=("NCHW", "OIHW", "NCHW"))
    y = y + bias[None, :, None, None]
    mean = jnp.mean(y, axis=(2, 3), keepdims=True)
    var = jnp.mean((y - mean) ** 2, axis=(2, 3), keepdims=True)
    return (y - mean) / jnp.sqrt(var + 1e-5)


if __name__ == "__main__":
    key = jax.random.PRNGKey(0)
    k1, k2, kw, kb = jax.random.split(key, 4)

    N, C1, C2, H, W = 2, 4, 4, 16, 16
    in_ch, out_ch = C1 + C2, 4

    x1 = jax.random.normal(k1, (N, C1, H, W), jnp.float32)
    x2 = jax.random.normal(k2, (N, C2, H, W), jnp.float32)

    bound = 1.0 / np.sqrt(in_ch * 4 * 4)
    weight = jax.random.uniform(kw, (in_ch, out_ch, 4, 4), jnp.float32,
                                -bound, bound)
    bias = jax.random.uniform(kb, (out_ch,), jnp.float32, -bound, bound)

    out = up_forward(x1, x2, weight, bias)
    out = jax.block_until_ready(out)
    assert out.shape == (N, out_ch, 2 * H, 2 * W)

    ref = up_reference(x1, x2, weight, bias)
    # Tolerance accounts for bf16 MXU inputs (f32 reference / f32 accumulation).
    np.testing.assert_allclose(np.asarray(out), np.asarray(ref),
                               atol=3e-2, rtol=3e-2)
    print("KERNEL_OK")
</pallas_src>

<mosaic_0001>
module attributes {stable_mosaic.version = 11 : i64} {
  func.func @_up_kernel(%arg0: i32, %arg1: memref<1x16x16x8xf32, #tpu.memory_space<vmem>>, %arg2: memref<2x48x8xbf16, #tpu.memory_space<vmem>>, %arg3: memref<1x16x16x16xf32, #tpu.memory_space<vmem>>) attributes {dimension_semantics = [#tpu.dimension_semantics<parallel>], iteration_bounds = array<i64: 2>, scalar_prefetch = 0 : i64, scratch_operands = 0 : i64, tpu.core_type = #tpu.core_type<tc>, window_params = [{transform_indices = @transform_0, window_bounds = array<i64: 1, 16, 16, 8>}, {pipeline_mode = #tpu.pipeline_mode<synchronous>, transform_indices = @transform_1, window_bounds = array<i64: 2, 48, 8>}, {transform_indices = @transform_2, window_bounds = array<i64: 1, 16, 16, 16>}]} {
    %c0 = arith.constant 0 : index
    %c0_0 = arith.constant 0 : index
    %c0_1 = arith.constant 0 : index
    %c0_2 = arith.constant 0 : index
    %0 = vector.load %arg1[%c0, %c0_0, %c0_1, %c0_2] : memref<1x16x16x8xf32, #tpu.memory_space<vmem>>, vector<1x16x16x8xf32>
    %1 = vector.shape_cast %0 : vector<1x16x16x8xf32> to vector<16x16x8xf32>
    %cst = arith.constant 0.000000e+00 : f32
    %2 = vector.broadcast %cst : f32 to vector<16x16x8xf32>
    %3 = arith.maximumf %1, %2 : vector<16x16x8xf32>
    %cst_3 = arith.constant 0.000000e+00 : f32
    %4 = vector.broadcast %cst_3 : f32 to vector<1x16x8xf32>
    %5 = tpu.concatenate %4, %3, %4 in 0 : vector<1x16x8xf32>, vector<16x16x8xf32>, vector<1x16x8xf32> -> vector<18x16x8xf32>
    %cst_4 = arith.constant 0.000000e+00 : f32
    %6 = vector.broadcast %cst_4 : f32 to vector<18x1x8xf32>
    %7 = tpu.concatenate %6, %5, %6 in 1 : vector<18x1x8xf32>, vector<18x16x8xf32>, vector<18x1x8xf32> -> vector<18x18x8xf32>
    %8 = vector.extract_strided_slice %7 {offsets = [0, 0, 0], sizes = [16, 16, 8], strides = [1, 1, 1]} : vector<18x18x8xf32> to vector<16x16x8xf32>
    %9 = vector.shape_cast %8 : vector<16x16x8xf32> to vector<256x8xf32>
    %10 = vector.extract_strided_slice %7 {offsets = [0, 1, 0], sizes = [16, 16, 8], strides = [1, 1, 1]} : vector<18x18x8xf32> to vector<16x16x8xf32>
    %11 = vector.shape_cast %10 : vector<16x16x8xf32> to vector<256x8xf32>
    %12 = vector.extract_strided_slice %7 {offsets = [0, 2, 0], sizes = [16, 16, 8], strides = [1, 1, 1]} : vector<18x18x8xf32> to vector<16x16x8xf32>
    %13 = vector.shape_cast %12 : vector<16x16x8xf32> to vector<256x8xf32>
    %14 = vector.extract_strided_slice %7 {offsets = [1, 0, 0], sizes = [16, 16, 8], strides = [1, 1, 1]} : vector<18x18x8xf32> to vector<16x16x8xf32>
    %15 = vector.shape_cast %14 : vector<16x16x8xf32> to vector<256x8xf32>
    %16 = vector.extract_strided_slice %7 {offsets = [1, 1, 0], sizes = [16, 16, 8], strides = [1, 1, 1]} : vector<18x18x8xf32> to vector<16x16x8xf32>
    %17 = vector.shape_cast %16 : vector<16x16x8xf32> to vector<256x8xf32>
    %18 = vector.extract_strided_slice %7 {offsets = [1, 2, 0], sizes = [16, 16, 8], strides = [1, 1, 1]} : vector<18x18x8xf32> to vector<16x16x8xf32>
    %19 = vector.shape_cast %18 : vector<16x16x8xf32> to vector<256x8xf32>
    %20 = vector.extract_strided_slice %7 {offsets = [2, 0, 0], sizes = [16, 16, 8], strides = [1, 1, 1]} : vector<18x18x8xf32> to vector<16x16x8xf32>
    %21 = vector.shape_cast %20 : vector<16x16x8xf32> to vector<256x8xf32>
    %22 = vector.extract_strided_slice %7 {offsets = [2, 1, 0], sizes = [16, 16, 8], strides = [1, 1, 1]} : vector<18x18x8xf32> to vector<16x16x8xf32>
    %23 = vector.shape_cast %22 : vector<16x16x8xf32> to vector<256x8xf32>
    %24 = vector.extract_strided_slice %7 {offsets = [2, 2, 0], sizes = [16, 16, 8], strides = [1, 1, 1]} : vector<18x18x8xf32> to vector<16x16x8xf32>
    %25 = vector.shape_cast %24 : vector<16x16x8xf32> to vector<256x8xf32>
    %26 = tpu.concatenate %9, %11, %13, %15, %17, %19 in 1 : vector<256x8xf32>, vector<256x8xf32>, vector<256x8xf32>, vector<256x8xf32>, vector<256x8xf32>, vector<256x8xf32> -> vector<256x48xf32>
    %27 = arith.truncf %26 : vector<256x48xf32> to vector<256x48xbf16>
    %c0_5 = arith.constant 0 : index
    %c0_6 = arith.constant 0 : index
    %c0_7 = arith.constant 0 : index
    %28 = vector.load %arg2[%c0_5, %c0_6, %c0_7] : memref<2x48x8xbf16, #tpu.memory_space<vmem>>, vector<1x48x8xbf16>
    %29 = vector.shape_cast %28 : vector<1x48x8xbf16> to vector<48x8xbf16>
    %cst_8 = arith.constant dense<0.000000e+00> : vector<256x8xf32>
    %30 = tpu.matmul %27, %29, %cst_8 {dimension_numbers = #tpu.dot_dimension_numbers<[1], [0], [0], [1], [0, 0, 1, 1], [], []>} : vector<256x48xbf16>, vector<48x8xbf16>, vector<256x8xf32> -> vector<256x8xf32>
    %31 = tpu.concatenate %15, %17, %19, %21, %23, %25 in 1 : vector<256x8xf32>, vector<256x8xf32>, vector<256x8xf32>, vector<256x8xf32>, vector<256x8xf32>, vector<256x8xf32> -> vector<256x48xf32>
    %32 = arith.truncf %31 : vector<256x48xf32> to vector<256x48xbf16>
    %c1 = arith.constant 1 : index
    %c0_9 = arith.constant 0 : index
    %c0_10 = arith.constant 0 : index
    %33 = vector.load %arg2[%c1, %c0_9, %c0_10] : memref<2x48x8xbf16, #tpu.memory_space<vmem>>, vector<1x48x8xbf16>
    %34 = vector.shape_cast %33 : vector<1x48x8xbf16> to vector<48x8xbf16>
    %cst_11 = arith.constant dense<0.000000e+00> : vector<256x8xf32>
    %35 = tpu.matmul %32, %34, %cst_11 {dimension_numbers = #tpu.dot_dimension_numbers<[1], [0], [0], [1], [0, 0, 1, 1], [], []>} : vector<256x48xbf16>, vector<48x8xbf16>, vector<256x8xf32> -> vector<256x8xf32>
    %36 = tpu.concatenate %30, %35 in 1 : vector<256x8xf32>, vector<256x8xf32> -> vector<256x16xf32>
    %cst_12 = arith.constant dense<0.000000e+00> : vector<16xf32>
    %37 = vector.multi_reduction <add>, %36, %cst_12 [0] : vector<256x16xf32> to vector<16xf32>
    %38 = vector.shape_cast %37 : vector<16xf32> to vector<1x16xf32>
    %39 = arith.mulf %36, %36 : vector<256x16xf32>
    %cst_13 = arith.constant dense<0.000000e+00> : vector<16xf32>
    %40 = vector.multi_reduction <add>, %39, %cst_13 [0] : vector<256x16xf32> to vector<16xf32>
    %41 = vector.shape_cast %40 : vector<16xf32> to vector<1x16xf32>
    %42 = vector.extract_strided_slice %38 {offsets = [0, 0], sizes = [1, 4], strides = [1, 1]} : vector<1x16xf32> to vector<1x4xf32>
    %43 = vector.extract_strided_slice %38 {offsets = [0, 4], sizes = [1, 4], strides = [1, 1]} : vector<1x16xf32> to vector<1x4xf32>
    %44 = arith.addf %42, %43 : vector<1x4xf32>
    %45 = vector.extract_strided_slice %38 {offsets = [0, 8], sizes = [1, 4], strides = [1, 1]} : vector<1x16xf32> to vector<1x4xf32>
    %46 = arith.addf %44, %45 : vector<1x4xf32>
    %47 = vector.extract_strided_slice %38 {offsets = [0, 12], sizes = [1, 4], strides = [1, 1]} : vector<1x16xf32> to vector<1x4xf32>
    %48 = arith.addf %46, %47 : vector<1x4xf32>
    %49 = vector.extract_strided_slice %41 {offsets = [0, 0], sizes = [1, 4], strides = [1, 1]} : vector<1x16xf32> to vector<1x4xf32>
    %50 = vector.extract_strided_slice %41 {offsets = [0, 4], sizes = [1, 4], strides = [1, 1]} : vector<1x16xf32> to vector<1x4xf32>
    %51 = arith.addf %49, %50 : vector<1x4xf32>
    %52 = vector.extract_strided_slice %41 {offsets = [0, 8], sizes = [1, 4], strides = [1, 1]} : vector<1x16xf32> to vector<1x4xf32>
    %53 = arith.addf %51, %52 : vector<1x4xf32>
    %54 = vector.extract_strided_slice %41 {offsets = [0, 12], sizes = [1, 4], strides = [1, 1]} : vector<1x16xf32> to vector<1x4xf32>
    %55 = arith.addf %53, %54 : vector<1x4xf32>
    %cst_14 = arith.constant 9.765625E-4 : f32
    %56 = vector.broadcast %cst_14 : f32 to vector<1x4xf32>
    %57 = arith.mulf %48, %56 : vector<1x4xf32>
    %cst_15 = arith.constant 9.765625E-4 : f32
    %58 = vector.broadcast %cst_15 : f32 to vector<1x4xf32>
    %59 = arith.mulf %55, %58 : vector<1x4xf32>
    %60 = arith.mulf %57, %57 : vector<1x4xf32>
    %61 = arith.subf %59, %60 : vector<1x4xf32>
    %cst_16 = arith.constant 9.99999974E-6 : f32
    %62 = vector.broadcast %cst_16 : f32 to vector<1x4xf32>
    %63 = arith.addf %61, %62 : vector<1x4xf32>
    %64 = math.rsqrt %63 : vector<1x4xf32>
    %65 = tpu.concatenate %57, %57, %57, %57 in 1 : vector<1x4xf32>, vector<1x4xf32>, vector<1x4xf32>, vector<1x4xf32> -> vector<1x16xf32>
    %66 = tpu.concatenate %64, %64, %64, %64 in 1 : vector<1x4xf32>, vector<1x4xf32>, vector<1x4xf32>, vector<1x4xf32> -> vector<1x16xf32>
    %67 = vector.broadcast %65 : vector<1x16xf32> to vector<256x16xf32>
    %68 = arith.subf %36, %67 : vector<256x16xf32>
    %69 = vector.broadcast %66 : vector<1x16xf32> to vector<256x16xf32>
    %70 = arith.mulf %68, %69 : vector<256x16xf32>
    %71 = vector.shape_cast %70 : vector<256x16xf32> to vector<16x16x16xf32>
    %c0_17 = arith.constant 0 : index
    %c0_18 = arith.constant 0 : index
    %c0_19 = arith.constant 0 : index
    %c0_20 = arith.constant 0 : index
    %72 = vector.load %arg3[%c0_17, %c0_18, %c0_19, %c0_20] : memref<1x16x16x16xf32, #tpu.memory_space<vmem>>, vector<1x16x16x16xf32>
    %73 = vector.shape_cast %72 : vector<1x16x16x16xf32> to vector<16x16x16xf32>
    %74 = vector.shape_cast %71 : vector<16x16x16xf32> to vector<1x16x16x16xf32>
    tpu.vector_store %arg3[%c0_17, %c0_18, %c0_19, %c0_20], %74 {strides = array<i32>} : memref<1x16x16x16xf32, #tpu.memory_space<vmem>>, vector<1x16x16x16xf32>,
    return
  }
  func.func @transform_0(%arg0: i32) -> (i32, i32, i32, i32) {
    %c0_i32 = arith.constant 0 : i32
    %c0_i32_0 = arith.constant 0 : i32
    %c0_i32_1 = arith.constant 0 : i32
    %c0_i32_2 = arith.constant 0 : i32
    return %arg0, %c0_i32, %c0_i32_0, %c0_i32_1 : i32, i32, i32, i32
  }
  func.func @transform_1(%arg0: i32) -> (i32, i32, i32) {
    %c0_i32 = arith.constant 0 : i32
    %c0_i32_0 = arith.constant 0 : i32
    %c0_i32_1 = arith.constant 0 : i32
    %c0_i32_2 = arith.constant 0 : i32
    return %c0_i32, %c0_i32_0, %c0_i32_1 : i32, i32, i32
  }
  func.func @transform_2(%arg0: i32) -> (i32, i32, i32, i32) {
    %c0_i32 = arith.constant 0 : i32
    %c0_i32_0 = arith.constant 0 : i32
    %c0_i32_1 = arith.constant 0 : i32
    %c0_i32_2 = arith.constant 0 : i32
    return %arg0, %c0_i32, %c0_i32_0, %c0_i32_1 : i32, i32, i32, i32
  }
}

</mosaic_0001>

<llo_original>
// kernel: tpu_custom_call.1
$region0: #{tpu_custom_call.1}
  #allocation0 [shape = 'u32[]', space=smem, size = 0x4, offset = 0x4, fixed_abs, tag = 'smem constant byte address 0x4 - core index']
  #allocation1 [shape = 'u32[144,128]{1,0:T(1,128)}', space=vmem, size = 0x12000, scoped, tag = 'internal scratch']
  %s0 = inlined_call_operand.vmem [shape: f32[2,16,16,8], index: 0, kind: input, shape index: {}]
  %s1 = inlined_call_operand.vmem [shape: bf16[2,48,8], index: 1, kind: input, shape index: {}]
  %s2 = inlined_call_operand.hbm [shape: f32[2,16,16,16], index: 2, kind: output, shape index: {}]
  %s3 = sld [smem:[#allocation0]]
  $region41: #{tpu_custom_call.1} parent=0
    _
  %s5 = ssub.s32 1, %s3
  %s6 = scalar_select 0, %s5, %s3
  $region1: #{tpu_custom_call.1} parent=0
    #allocation2 [shape = 'u8[262144]{0}', space=vmem, size = 0x40000, scoped, tag = 'output window, operand 0']
    #allocation3 [shape = 's32[2]{0}', space=sflag, size = 0x8, scoped, tag = 'scoped memory for tpu_custom_call.1']
    %7 = vsyncpa [#allocation3], 0
    %s8 = scalar_lea.sflag [#allocation3], 1
    %9 = vsyncpa %s8, 0
    loop: start=0, step=1, limit=4
    $region2: #{tpu_custom_call.1} parent=1 // loop_pre_header
      _
    $region3: #{tpu_custom_call.1} parent=1 // loop_header
      %s11 = sphi 0, %s15
      %p12 = scmp.ge.s32.totalorder %s11, 4
      %s21 = sphi 0, %s23
      %s24 = sphi 0, %s21
      %s25 = sphi 0, %s24
      %s41 = sphi 0, %s25
      %s45 = sphi 0, %s45
      %s47 = sphi 0, %s45
      %s48 = sphi 0, %s47
      %s62 = sphi 0, %s48
      %s68 = sphi 0, %s70
      %s71 = sphi 0, %s68
      %s72 = sphi 0, %s71
      %s88 = sphi 0, %s72
    $region4: #{tpu_custom_call.1} parent=1 // loop_header_branch
      %14 = sbr.rel (%p12) target = $region8
    $region5: #{tpu_custom_call.1} parent=1 // loop_body
      %s16 = ssub.s32 %s11, 1
      %s17 = ssub.s32 %s11, 2
      %s18 = sadd.s32 %s11, 1
      %s19 = ssub.s32 %s11, %s18
      %p20 = scmp.eq.s32.totalorder %s19, 0
      %s22 = sadd.s32 %s21, 1
      %s23 = scalar_select %p20, %s21, %s22
      %p26 = pneg %p20
      %p27 = scmp.eq.s32.totalorder %s11, 1
      %p28 = por %p26, %p27
      %p29 = scmp.ne.s32.totalorder %s21, %s24
      %p30 = scmp.eq.s32.totalorder %s11, 0
      %p31 = por %p29, %p30
      %p32 = scmp.ne.s32.totalorder %s21, %s24
      %p33 = scmp.eq.s32.totalorder %s16, 1
      %p34 = por %p32, %p33
      %p35 = scmp.ne.s32.totalorder %s24, %s25
      %p36 = scmp.eq.s32.totalorder %s16, 0
      %p37 = por %p35, %p36
      %p38 = scmp.ne.s32.totalorder %s24, %s25
      %p39 = scmp.eq.s32.totalorder %s17, 1
      %p40 = por %p38, %p39
      %p42 = scmp.ne.s32.totalorder %s25, %s41
      %p43 = scmp.eq.s32.totalorder %s17, 0
      %p44 = por %p42, %p43
      %s46 = sadd.s32 %s45, 1
      %p49 = scmp.eq.s32.totalorder %s11, 1
      %p50 = scmp.ne.s32.totalorder %s45, %s47
      %p51 = scmp.eq.s32.totalorder %s11, 0
      %p52 = por %p50, %p51
      %p53 = scmp.ne.s32.totalorder %s45, %s47
      %p54 = scmp.eq.s32.totalorder %s16, 1
      %p55 = por %p53, %p54
      %p56 = scmp.ne.s32.totalorder %s47, %s48
      %p57 = scmp.eq.s32.totalorder %s16, 0
      %p58 = por %p56, %p57
      %p59 = scmp.ne.s32.totalorder %s47, %s48
      %p60 = scmp.eq.s32.totalorder %s17, 1
      %p61 = por %p59, %p60
      %p63 = scmp.ne.s32.totalorder %s48, %s62
      %p64 = scmp.eq.s32.totalorder %s17, 0
      %p65 = por %p63, %p64
      %s66 = ssub.s32 %s11, %s18
      %p67 = scmp.eq.s32.totalorder %s66, 0
      %s69 = sadd.s32 %s68, 1
      %s70 = scalar_select %p67, %s68, %s69
      %p73 = pneg %p67
      %p74 = scmp.eq.s32.totalorder %s11, 1
      %p75 = por %p73, %p74
      %p76 = scmp.ne.s32.totalorder %s68, %s71
      %p77 = scmp.eq.s32.totalorder %s11, 0
      %p78 = por %p76, %p77
      %p79 = scmp.ne.s32.totalorder %s68, %s71
      %p80 = scmp.eq.s32.totalorder %s16, 1
      %p81 = por %p79, %p80
      %p82 = scmp.ne.s32.totalorder %s71, %s72
      %p83 = scmp.eq.s32.totalorder %s16, 0
      %p84 = por %p82, %p83
      %p85 = scmp.ne.s32.totalorder %s71, %s72
      %p86 = scmp.eq.s32.totalorder %s17, 1
      %p87 = por %p85, %p86
      %p89 = scmp.ne.s32.totalorder %s72, %s88
      %p90 = scmp.eq.s32.totalorder %s17, 0
      %p91 = por %p89, %p90
      %p92 = scmp.le.s32.totalorder 1, %s11
      %p93 = scmp.lt.s32.totalorder %s11, 3
      %p94 = pnand %p92, %p93
      %p95 = pneg %p94
      // Predicated region
      $region9: #{tpu_custom_call.1} parent=5 // pred_check
        _
      $region10: #{tpu_custom_call.1} parent=5 // pred_check_branch
        %97 = sbr.rel (%p94) target = $region12
      $region11: #{tpu_custom_call.1} parent=5 // pred_region
        %s98 = ssub.s32 %s11, 1
        // Predicated region
        $region13: #{tpu_custom_call.1} parent=11 // pred_check
          %p99 = pneg %p58
        $region14: #{tpu_custom_call.1} parent=11 // pred_check_branch
          %101 = sbr.rel (%p99) target = $region16
        $region15: #{tpu_custom_call.1} parent=11 // pred_region
          _
        $region16: #{tpu_custom_call.1} parent=11 // pred_fallthru
          _
      $region12: #{tpu_custom_call.1} parent=5 // pred_fallthru
        _
      %p102 = scmp.lt.s32.totalorder %s11, 2
      // Predicated region
      $region17: #{tpu_custom_call.1} parent=5 // pred_check
        %p103 = pneg %p102
      $region18: #{tpu_custom_call.1} parent=5 // pred_check_branch
        %105 = sbr.rel (%p103) target = $region20
      $region19: #{tpu_custom_call.1} parent=5 // pred_region
        // Predicated region
        $region21: #{tpu_custom_call.1} parent=19 // pred_check
          %p106 = pneg %p31
        $region22: #{tpu_custom_call.1} parent=19 // pred_check_branch
          %108 = sbr.rel (%p106) target = $region24
        $region23: #{tpu_custom_call.1} parent=19 // pred_region
          %p109 = scmp.lt.s32.totalorder %s11, 1
          %s110 = scalar_select %p109, %s11, 1
          %s111 = smul.addr %s110, 32
          %s112 = smul.addr %s111, 8
          %s113 = scalar_lea.vmem %s0, %s112
        $region24: #{tpu_custom_call.1} parent=19 // pred_fallthru
          _
      $region20: #{tpu_custom_call.1} parent=5 // pred_fallthru
        _
      %p114 = scmp.le.s32.totalorder 1, %s11
      %p115 = scmp.lt.s32.totalorder %s11, 3
      %p116 = pnand %p114, %p115
      %p117 = pneg %p116
      // Predicated region
      $region25: #{tpu_custom_call.1} parent=5 // pred_check
        _
      $region26: #{tpu_custom_call.1} parent=5 // pred_check_branch
        %119 = sbr.rel (%p116) target = $region28
      $region27: #{tpu_custom_call.1} parent=5 // pred_region
        %s120 = ssub.s32 %s11, 1
        %p121 = scmp.lt.s32.totalorder %s16, 1
        %s122 = scalar_select %p121, %s16, 1
        %s123 = smul.addr %s122, 32
        %s124 = smul.addr %s123, 8
        %s125 = scalar_lea.vmem %s0, %s124
        %p126 = pneg %p37
        %p127 = pneg %p34
        %p128 = pneg %p58
        %p129 = pneg %p55
        %p130 = pneg %p84
        %p131 = pneg %p81
        %s132 = sand.u32 %s71, 1
        %s133 = scalar_lea.sflag [#allocation3], %s132
        %s134 = sand.u32 %s71, 1
        %s135 = smul.addr %s134, 256
        %s136 = scalar_lea.vmem [#allocation2], %s135
        %p137 = scmp.lt.s32.totalorder %s16, 1
        %s138 = scalar_select %p137, %s16, 1
        %s139 = smul.addr %s138, 32
        %s140 = smul.addr %s139, 8
        %s141 = scalar_lea.vmem %s0, %s140
        %v143 = vld [vmem:[%s141] sm:$0xff]
        %v144 = vld [vmem:[%s141 + $0x8] sm:$0xff]
        %v145 = vld [vmem:[%s141 + $0x10] sm:$0xff]
        %v146 = vld [vmem:[%s141 + $0x18] sm:$0xff]
        %v147 = vld [vmem:[%s141 + $0x20] sm:$0xff]
        %v148 = vld [vmem:[%s141 + $0x28] sm:$0xff]
        %v149 = vld [vmem:[%s141 + $0x30] sm:$0xff]
        %v150 = vld [vmem:[%s141 + $0x38] sm:$0xff]
        %v151 = vld [vmem:[%s141 + $0x40] sm:$0xff]
        %v152 = vld [vmem:[%s141 + $0x48] sm:$0xff]
        %v153 = vld [vmem:[%s141 + $0x50] sm:$0xff]
        %v154 = vld [vmem:[%s141 + $0x58] sm:$0xff]
        %v155 = vld [vmem:[%s141 + $0x60] sm:$0xff]
        %v156 = vld [vmem:[%s141 + $0x68] sm:$0xff]
        %v157 = vld [vmem:[%s141 + $0x70] sm:$0xff]
        %v158 = vld [vmem:[%s141 + $0x78] sm:$0xff]
        %v159 = vld [vmem:[%s141 + $0x80] sm:$0xff]
        %v160 = vld [vmem:[%s141 + $0x88] sm:$0xff]
        %v161 = vld [vmem:[%s141 + $0x90] sm:$0xff]
        %v162 = vld [vmem:[%s141 + $0x98] sm:$0xff]
        %v163 = vld [vmem:[%s141 + $0xa0] sm:$0xff]
        %v164 = vld [vmem:[%s141 + $0xa8] sm:$0xff]
        %v165 = vld [vmem:[%s141 + $0xb0] sm:$0xff]
        %v166 = vld [vmem:[%s141 + $0xb8] sm:$0xff]
        %v167 = vld [vmem:[%s141 + $0xc0] sm:$0xff]
        %v168 = vld [vmem:[%s141 + $0xc8] sm:$0xff]
        %v169 = vld [vmem:[%s141 + $0xd0] sm:$0xff]
        %v170 = vld [vmem:[%s141 + $0xd8] sm:$0xff]
        %v171 = vld [vmem:[%s141 + $0xe0] sm:$0xff]
        %v172 = vld [vmem:[%s141 + $0xe8] sm:$0xff]
        %v173 = vld [vmem:[%s141 + $0xf0] sm:$0xff]
        %v174 = vld [vmem:[%s141 + $0xf8] sm:$0xff]
        %v175 = vmax.f32 %v143, 0.0
        %v176 = vmax.f32 %v144, 0.0
        %v177 = vmax.f32 %v145, 0.0
        %v178 = vmax.f32 %v146, 0.0
        %v179 = vmax.f32 %v147, 0.0
        %v180 = vmax.f32 %v148, 0.0
        %v181 = vmax.f32 %v149, 0.0
        %v182 = vmax.f32 %v150, 0.0
        %v183 = vmax.f32 %v151, 0.0
        %v184 = vmax.f32 %v152, 0.0
        %v185 = vmax.f32 %v153, 0.0
        %v186 = vmax.f32 %v154, 0.0
        %v187 = vmax.f32 %v155, 0.0
        %v188 = vmax.f32 %v156, 0.0
        %v189 = vmax.f32 %v157, 0.0
        %v190 = vmax.f32 %v158, 0.0
        %v191 = vmax.f32 %v159, 0.0
        %v192 = vmax.f32 %v160, 0.0
        %v193 = vmax.f32 %v161, 0.0
        %v194 = vmax.f32 %v162, 0.0
        %v195 = vmax.f32 %v163, 0.0
        %v196 = vmax.f32 %v164, 0.0
        %v197 = vmax.f32 %v165, 0.0
        %v198 = vmax.f32 %v166, 0.0
        %v199 = vmax.f32 %v167, 0.0
        %v200 = vmax.f32 %v168, 0.0
        %v201 = vmax.f32 %v169, 0.0
        %v202 = vmax.f32 %v170, 0.0
        %v203 = vmax.f32 %v171, 0.0
        %v204 = vmax.f32 %v172, 0.0
        %v205 = vmax.f32 %v173, 0.0
        %v206 = vmax.f32 %v174, 0.0
        %vm240 = vcmask 1040384
        %v241 = vrot.slane 0.0, 7
        %v242 = vsel %vm240, %v241, %v241
        %v243 = vrot.slane %v175, 7
        %v244 = vrot.slane %v176, 7
        %v245 = vsel %vm240, %v243, %v244
        %v246 = vrot.slane %v177, 7
        %v247 = vrot.slane %v178, 7
        %v248 = vsel %vm240, %v246, %v247
        %v249 = vrot.slane %v179, 7
        %v250 = vrot.slane %v180, 7
        %v251 = vsel %vm240, %v249, %v250
        %v252 = vrot.slane %v181, 7
        %v253 = vrot.slane %v182, 7
        %v254 = vsel %vm240, %v252, %v253
        %v255 = vrot.slane %v183, 7
        %v256 = vrot.slane %v184, 7
        %v257 = vsel %vm240, %v255, %v256
        %v258 = vrot.slane %v185, 7
        %v259 = vrot.slane %v186, 7
        %v260 = vsel %vm240, %v258, %v259
        %v261 = vrot.slane %v187, 7
        %v262 = vrot.slane %v188, 7
        %v263 = vsel %vm240, %v261, %v262
        %v264 = vrot.slane %v189, 7
        %v265 = vrot.slane %v190, 7
        %v266 = vsel %vm240, %v264, %v265
        %v267 = vrot.slane %v191, 7
        %v268 = vrot.slane %v192, 7
        %v269 = vsel %vm240, %v267, %v268
        %v270 = vrot.slane %v193, 7
        %v271 = vrot.slane %v194, 7
        %v272 = vsel %vm240, %v270, %v271
        %v273 = vrot.slane %v195, 7
        %v274 = vrot.slane %v196, 7
        %v275 = vsel %vm240, %v273, %v274
        %v276 = vrot.slane %v197, 7
        %v277 = vrot.slane %v198, 7
        %v278 = vsel %vm240, %v276, %v277
        %v279 = vrot.slane %v199, 7
        %v280 = vrot.slane %v200, 7
        %v281 = vsel %vm240, %v279, %v280
        %v282 = vrot.slane %v201, 7
        %v283 = vrot.slane %v202, 7
        %v284 = vsel %vm240, %v282, %v283
        %v285 = vrot.slane %v203, 7
        %v286 = vrot.slane %v204, 7
        %v287 = vsel %vm240, %v285, %v286
        %v288 = vrot.slane %v205, 7
        %v289 = vrot.slane %v206, 7
        %v290 = vsel %vm240, %v288, %v289
        %v341 = vsel %vm240, 0.0, %v241
        %v342 = vsel %vm240, 0.0, %v243
        %v343 = vsel %vm240, 0.0, %v246
        %v344 = vsel %vm240, 0.0, %v249
        %v345 = vsel %vm240, 0.0, %v252
        %v346 = vsel %vm240, 0.0, %v255
        %v347 = vsel %vm240, 0.0, %v258
        %v348 = vsel %vm240, 0.0, %v261
        %v349 = vsel %vm240, 0.0, %v264
        %v350 = vsel %vm240, 0.0, %v267
        %v351 = vsel %vm240, 0.0, %v270
        %v352 = vsel %vm240, 0.0, %v273
        %v353 = vsel %vm240, 0.0, %v276
        %v354 = vsel %vm240, 0.0, %v279
        %v355 = vsel %vm240, 0.0, %v282
        %v356 = vsel %vm240, 0.0, %v285
        %v357 = vsel %vm240, 0.0, %v288
        %v358 = vsel %vm240, %v241, 0.0
        %v359 = vsel %vm240, %v244, 0.0
        %v360 = vsel %vm240, %v247, 0.0
        %v361 = vsel %vm240, %v250, 0.0
        %v362 = vsel %vm240, %v253, 0.0
        %v363 = vsel %vm240, %v256, 0.0
        %v364 = vsel %vm240, %v259, 0.0
        %v365 = vsel %vm240, %v262, 0.0
        %v366 = vsel %vm240, %v265, 0.0
        %v367 = vsel %vm240, %v268, 0.0
        %v368 = vsel %vm240, %v271, 0.0
        %v369 = vsel %vm240, %v274, 0.0
        %v370 = vsel %vm240, %v277, 0.0
        %v371 = vsel %vm240, %v280, 0.0
        %v372 = vsel %vm240, %v283, 0.0
        %v373 = vsel %vm240, %v286, 0.0
        %v374 = vsel %vm240, %v289, 0.0
        %vm407 = vcmask 1046528
        %v408 = vrot.slane %v341, 1
        %v409 = vrot.slane %v242, 1
        %v410 = vsel %vm407, %v408, %v409
        %v411 = vrot.slane %v358, 1
        %v412 = vsel %vm407, %v409, %v411
        %v413 = vrot.slane %v342, 1
        %v414 = vrot.slane %v245, 1
        %v415 = vsel %vm407, %v413, %v414
        %v416 = vrot.slane %v359, 1
        %v417 = vsel %vm407, %v414, %v416
        %v418 = vrot.slane %v343, 1
        %v419 = vrot.slane %v248, 1
        %v420 = vsel %vm407, %v418, %v419
        %v421 = vrot.slane %v360, 1
        %v422 = vsel %vm407, %v419, %v421
        %v423 = vrot.slane %v344, 1
        %v424 = vrot.slane %v251, 1
        %v425 = vsel %vm407, %v423, %v424
        %v426 = vrot.slane %v361, 1
        %v427 = vsel %vm407, %v424, %v426
        %v428 = vrot.slane %v345, 1
        %v429 = vrot.slane %v254, 1
        %v430 = vsel %vm407, %v428, %v429
        %v431 = vrot.slane %v362, 1
        %v432 = vsel %vm407, %v429, %v431
        %v433 = vrot.slane %v346, 1
        %v434 = vrot.slane %v257, 1
        %v435 = vsel %vm407, %v433, %v434
        %v436 = vrot.slane %v363, 1
        %v437 = vsel %vm407, %v434, %v436
        %v438 = vrot.slane %v347, 1
        %v439 = vrot.slane %v260, 1
        %v440 = vsel %vm407, %v438, %v439
        %v441 = vrot.slane %v364, 1
        %v442 = vsel %vm407, %v439, %v441
        %v443 = vrot.slane %v348, 1
        %v444 = vrot.slane %v263, 1
        %v445 = vsel %vm407, %v443, %v444
        %v446 = vrot.slane %v365, 1
        %v447 = vsel %vm407, %v444, %v446
        %v448 = vrot.slane %v349, 1
        %v449 = vrot.slane %v266, 1
        %v450 = vsel %vm407, %v448, %v449
        %v451 = vrot.slane %v366, 1
        %v452 = vsel %vm407, %v449, %v451
        %v453 = vrot.slane %v350, 1
        %v454 = vrot.slane %v269, 1
        %v455 = vsel %vm407, %v453, %v454
        %v456 = vrot.slane %v367, 1
        %v457 = vsel %vm407, %v454, %v456
        %v458 = vrot.slane %v351, 1
        %v459 = vrot.slane %v272, 1
        %v460 = vsel %vm407, %v458, %v459
        %v461 = vrot.slane %v368, 1
        %v462 = vsel %vm407, %v459, %v461
        %v463 = vrot.slane %v352, 1
        %v464 = vrot.slane %v275, 1
        %v465 = vsel %vm407, %v463, %v464
        %v466 = vrot.slane %v369, 1
        %v467 = vsel %vm407, %v464, %v466
        %v468 = vrot.slane %v353, 1
        %v469 = vrot.slane %v278, 1
        %v470 = vsel %vm407, %v468, %v469
        %v471 = vrot.slane %v370, 1
        %v472 = vsel %vm407, %v469, %v471
        %v473 = vrot.slane %v354, 1
        %v474 = vrot.slane %v281, 1
        %v475 = vsel %vm407, %v473, %v474
        %v476 = vrot.slane %v371, 1
        %v477 = vsel %vm407, %v474, %v476
        %v478 = vrot.slane %v355, 1
        %v479 = vrot.slane %v284, 1
        %v480 = vsel %vm407, %v478, %v479
        %v481 = vrot.slane %v372, 1
        %v482 = vsel %vm407, %v479, %v481
        %v483 = vrot.slane %v356, 1
        %v484 = vrot.slane %v287, 1
        %v485 = vsel %vm407, %v483, %v484
        %v486 = vrot.slane %v373, 1
        %v487 = vsel %vm407, %v484, %v486
        %vm488 = vcmask 1045504
        %v489 = vrot.slane %v341, 2
        %v490 = vrot.slane %v242, 2
        %v491 = vsel %vm488, %v489, %v490
        %v492 = vrot.slane %v358, 2
        %v493 = vsel %vm488, %v490, %v492
        %v494 = vrot.slane %v342, 2
        %v495 = vrot.slane %v245, 2
        %v496 = vsel %vm488, %v494, %v495
        %v497 = vrot.slane %v359, 2
        %v498 = vsel %vm488, %v495, %v497
        %v499 = vrot.slane %v343, 2
        %v500 = vrot.slane %v248, 2
        %v501 = vsel %vm488, %v499, %v500
        %v502 = vrot.slane %v360, 2
        %v503 = vsel %vm488, %v500, %v502
        %v504 = vrot.slane %v344, 2
        %v505 = vrot.slane %v251, 2
        %v506 = vsel %vm488, %v504, %v505
        %v507 = vrot.slane %v361, 2
        %v508 = vsel %vm488, %v505, %v507
        %v509 = vrot.slane %v345, 2
        %v510 = vrot.slane %v254, 2
        %v511 = vsel %vm488, %v509, %v510
        %v512 = vrot.slane %v362, 2
        %v513 = vsel %vm488, %v510, %v512
        %v514 = vrot.slane %v346, 2
        %v515 = vrot.slane %v257, 2
        %v516 = vsel %vm488, %v514, %v515
        %v517 = vrot.slane %v363, 2
        %v518 = vsel %vm488, %v515, %v517
        %v519 = vrot.slane %v347, 2
        %v520 = vrot.slane %v260, 2
        %v521 = vsel %vm488, %v519, %v520
        %v522 = vrot.slane %v364, 2
        %v523 = vsel %vm488, %v520, %v522
        %v524 = vrot.slane %v348, 2
        %v525 = vrot.slane %v263, 2
        %v526 = vsel %vm488, %v524, %v525
        %v527 = vrot.slane %v365, 2
        %v528 = vsel %vm488, %v525, %v527
        %v529 = vrot.slane %v349, 2
        %v530 = vrot.slane %v266, 2
        %v531 = vsel %vm488, %v529, %v530
        %v532 = vrot.slane %v366, 2
        %v533 = vsel %vm488, %v530, %v532
        %v534 = vrot.slane %v350, 2
        %v535 = vrot.slane %v269, 2
        %v536 = vsel %vm488, %v534, %v535
        %v537 = vrot.slane %v367, 2
        %v538 = vsel %vm488, %v535, %v537
        %v539 = vrot.slane %v351, 2
        %v540 = vrot.slane %v272, 2
        %v541 = vsel %vm488, %v539, %v540
        %v542 = vrot.slane %v368, 2
        %v543 = vsel %vm488, %v540, %v542
        %v544 = vrot.slane %v352, 2
        %v545 = vrot.slane %v275, 2
        %v546 = vsel %vm488, %v544, %v545
        %v547 = vrot.slane %v369, 2
        %v548 = vsel %vm488, %v545, %v547
        %v549 = vrot.slane %v353, 2
        %v550 = vrot.slane %v278, 2
        %v551 = vsel %vm488, %v549, %v550
        %v552 = vrot.slane %v370, 2
        %v553 = vsel %vm488, %v550, %v552
        %v554 = vrot.slane %v354, 2
        %v555 = vrot.slane %v281, 2
        %v556 = vsel %vm488, %v554, %v555
        %v557 = vrot.slane %v371, 2
        %v558 = vsel %vm488, %v555, %v557
        %v559 = vrot.slane %v355, 2
        %v560 = vrot.slane %v284, 2
        %v561 = vsel %vm488, %v559, %v560
        %v562 = vrot.slane %v372, 2
        %v563 = vsel %vm488, %v560, %v562
        %v564 = vrot.slane %v356, 2
        %v565 = vrot.slane %v287, 2
        %v566 = vsel %vm488, %v564, %v565
        %v567 = vrot.slane %v373, 2
        %v568 = vsel %vm488, %v565, %v567
        %v571 = vrot.slane %v357, 1
        %v572 = vrot.slane %v290, 1
        %v573 = vsel %vm407, %v571, %v572
        %v574 = vrot.slane %v374, 1
        %v575 = vsel %vm407, %v572, %v574
        %v576 = vrot.slane %v357, 2
        %v577 = vrot.slane %v290, 2
        %v578 = vsel %vm488, %v576, %v577
        %v579 = vrot.slane %v374, 2
        %v580 = vsel %vm488, %v577, %v579
        %581 = vrot.lane.b32.xlu0 %v410, 8
        %v582 = vpop.permute.xlu0 %581
        %583 = vrot.lane.b32.xlu0 %v412, 8
        %v584 = vpop.permute.xlu0 %583
        %585 = vrot.lane.b32.xlu0 %v415, 8
        %v586 = vpop.permute.xlu0 %585
        %587 = vrot.lane.b32.xlu0 %v417, 8
        %v588 = vpop.permute.xlu0 %587
        %589 = vrot.lane.b32.xlu0 %v420, 8
        %v590 = vpop.permute.xlu0 %589
        %591 = vrot.lane.b32.xlu0 %v422, 8
        %v592 = vpop.permute.xlu0 %591
        %593 = vrot.lane.b32.xlu0 %v425, 8
        %v594 = vpop.permute.xlu0 %593
        %595 = vrot.lane.b32.xlu0 %v427, 8
        %v596 = vpop.permute.xlu0 %595
        %597 = vrot.lane.b32.xlu0 %v430, 8
        %v598 = vpop.permute.xlu0 %597
        %599 = vrot.lane.b32.xlu0 %v432, 8
        %v600 = vpop.permute.xlu0 %599
        %601 = vrot.lane.b32.xlu0 %v435, 8
        %v602 = vpop.permute.xlu0 %601
        %603 = vrot.lane.b32.xlu0 %v437, 8
        %v604 = vpop.permute.xlu0 %603
        %605 = vrot.lane.b32.xlu0 %v440, 8
        %v606 = vpop.permute.xlu0 %605
        %607 = vrot.lane.b32.xlu0 %v442, 8
        %v608 = vpop.permute.xlu0 %607
        %609 = vrot.lane.b32.xlu0 %v445, 8
        %v610 = vpop.permute.xlu0 %609
        %611 = vrot.lane.b32.xlu0 %v447, 8
        %v612 = vpop.permute.xlu0 %611
        %613 = vrot.lane.b32.xlu0 %v450, 8
        %v614 = vpop.permute.xlu0 %613
        %615 = vrot.lane.b32.xlu0 %v452, 8
        %v616 = vpop.permute.xlu0 %615
        %617 = vrot.lane.b32.xlu0 %v455, 8
        %v618 = vpop.permute.xlu0 %617
        %619 = vrot.lane.b32.xlu0 %v457, 8
        %v620 = vpop.permute.xlu0 %619
        %621 = vrot.lane.b32.xlu0 %v460, 8
        %v622 = vpop.permute.xlu0 %621
        %623 = vrot.lane.b32.xlu0 %v462, 8
        %v624 = vpop.permute.xlu0 %623
        %625 = vrot.lane.b32.xlu0 %v465, 8
        %v626 = vpop.permute.xlu0 %625
        %627 = vrot.lane.b32.xlu0 %v467, 8
        %v628 = vpop.permute.xlu0 %627
        %629 = vrot.lane.b32.xlu0 %v470, 8
        %v630 = vpop.permute.xlu0 %629
        %631 = vrot.lane.b32.xlu0 %v472, 8
        %v632 = vpop.permute.xlu0 %631
        %633 = vrot.lane.b32.xlu0 %v475, 8
        %v634 = vpop.permute.xlu0 %633
        %635 = vrot.lane.b32.xlu0 %v477, 8
        %v636 = vpop.permute.xlu0 %635
        %637 = vrot.lane.b32.xlu0 %v480, 8
        %v638 = vpop.permute.xlu0 %637
        %639 = vrot.lane.b32.xlu0 %v482, 8
        %v640 = vpop.permute.xlu0 %639
        %641 = vrot.lane.b32.xlu0 %v485, 8
        %v642 = vpop.permute.xlu0 %641
        %643 = vrot.lane.b32.xlu0 %v487, 8
        %v644 = vpop.permute.xlu0 %643
        %677 = vrot.lane.b32.xlu0 %v491, 16
        %v678 = vpop.permute.xlu0 %677
        %679 = vrot.lane.b32.xlu0 %v493, 16
        %v680 = vpop.permute.xlu0 %679
        %681 = vrot.lane.b32.xlu0 %v496, 16
        %v682 = vpop.permute.xlu0 %681
        %683 = vrot.lane.b32.xlu0 %v498, 16
        %v684 = vpop.permute.xlu0 %683
        %685 = vrot.lane.b32.xlu0 %v501, 16
        %v686 = vpop.permute.xlu0 %685
        %687 = vrot.lane.b32.xlu0 %v503, 16
        %v688 = vpop.permute.xlu0 %687
        %689 = vrot.lane.b32.xlu0 %v506, 16
        %v690 = vpop.permute.xlu0 %689
        %691 = vrot.lane.b32.xlu0 %v508, 16
        %v692 = vpop.permute.xlu0 %691
        %693 = vrot.lane.b32.xlu0 %v511, 16
        %v694 = vpop.permute.xlu0 %693
        %695 = vrot.lane.b32.xlu0 %v513, 16
        %v696 = vpop.permute.xlu0 %695
        %697 = vrot.lane.b32.xlu0 %v516, 16
        %v698 = vpop.permute.xlu0 %697
        %699 = vrot.lane.b32.xlu0 %v518, 16
        %v700 = vpop.permute.xlu0 %699
        %701 = vrot.lane.b32.xlu0 %v521, 16
        %v702 = vpop.permute.xlu0 %701
        %703 = vrot.lane.b32.xlu0 %v523, 16
        %v704 = vpop.permute.xlu0 %703
        %705 = vrot.lane.b32.xlu0 %v526, 16
        %v706 = vpop.permute.xlu0 %705
        %707 = vrot.lane.b32.xlu0 %v528, 16
        %v708 = vpop.permute.xlu0 %707
        %709 = vrot.lane.b32.xlu0 %v531, 16
        %v710 = vpop.permute.xlu0 %709
        %711 = vrot.lane.b32.xlu0 %v533, 16
        %v712 = vpop.permute.xlu0 %711
        %713 = vrot.lane.b32.xlu0 %v536, 16
        %v714 = vpop.permute.xlu0 %713
        %715 = vrot.lane.b32.xlu0 %v538, 16
        %v716 = vpop.permute.xlu0 %715
        %717 = vrot.lane.b32.xlu0 %v541, 16
        %v718 = vpop.permute.xlu0 %717
        %719 = vrot.lane.b32.xlu0 %v543, 16
        %v720 = vpop.permute.xlu0 %719
        %721 = vrot.lane.b32.xlu0 %v546, 16
        %v722 = vpop.permute.xlu0 %721
        %723 = vrot.lane.b32.xlu0 %v548, 16
        %v724 = vpop.permute.xlu0 %723
        %725 = vrot.lane.b32.xlu0 %v551, 16
        %v726 = vpop.permute.xlu0 %725
        %727 = vrot.lane.b32.xlu0 %v553, 16
        %v728 = vpop.permute.xlu0 %727
        %729 = vrot.lane.b32.xlu0 %v556, 16
        %v730 = vpop.permute.xlu0 %729
        %731 = vrot.lane.b32.xlu0 %v558, 16
        %v732 = vpop.permute.xlu0 %731
        %733 = vrot.lane.b32.xlu0 %v561, 16
        %v734 = vpop.permute.xlu0 %733
        %735 = vrot.lane.b32.xlu0 %v563, 16
        %v736 = vpop.permute.xlu0 %735
        %737 = vrot.lane.b32.xlu0 %v566, 16
        %v738 = vpop.permute.xlu0 %737
        %739 = vrot.lane.b32.xlu0 %v568, 16
        %v740 = vpop.permute.xlu0 %739
        %773 = vrot.lane.b32.xlu0 %v342, 24
        %v774 = vpop.permute.xlu0 %773
        %775 = vrot.lane.b32.xlu0 %v245, 24
        %v776 = vpop.permute.xlu0 %775
        %777 = vrot.lane.b32.xlu0 %v343, 24
        %v778 = vpop.permute.xlu0 %777
        %779 = vrot.lane.b32.xlu0 %v248, 24
        %v780 = vpop.permute.xlu0 %779
        %781 = vrot.lane.b32.xlu0 %v344, 24
        %v782 = vpop.permute.xlu0 %781
        %783 = vrot.lane.b32.xlu0 %v251, 24
        %v784 = vpop.permute.xlu0 %783
        %785 = vrot.lane.b32.xlu0 %v345, 24
        %v786 = vpop.permute.xlu0 %785
        %787 = vrot.lane.b32.xlu0 %v254, 24
        %v788 = vpop.permute.xlu0 %787
        %789 = vrot.lane.b32.xlu0 %v346, 24
        %v790 = vpop.permute.xlu0 %789
        %791 = vrot.lane.b32.xlu0 %v257, 24
        %v792 = vpop.permute.xlu0 %791
        %793 = vrot.lane.b32.xlu0 %v347, 24
        %v794 = vpop.permute.xlu0 %793
        %795 = vrot.lane.b32.xlu0 %v260, 24
        %v796 = vpop.permute.xlu0 %795
        %797 = vrot.lane.b32.xlu0 %v348, 24
        %v798 = vpop.permute.xlu0 %797
        %799 = vrot.lane.b32.xlu0 %v263, 24
        %v800 = vpop.permute.xlu0 %799
        %801 = vrot.lane.b32.xlu0 %v349, 24
        %v802 = vpop.permute.xlu0 %801
        %803 = vrot.lane.b32.xlu0 %v266, 24
        %v804 = vpop.permute.xlu0 %803
        %805 = vrot.lane.b32.xlu0 %v350, 24
        %v806 = vpop.permute.xlu0 %805
        %807 = vrot.lane.b32.xlu0 %v269, 24
        %v808 = vpop.permute.xlu0 %807
        %809 = vrot.lane.b32.xlu0 %v351, 24
        %v810 = vpop.permute.xlu0 %809
        %811 = vrot.lane.b32.xlu0 %v272, 24
        %v812 = vpop.permute.xlu0 %811
        %813 = vrot.lane.b32.xlu0 %v352, 24
        %v814 = vpop.permute.xlu0 %813
        %815 = vrot.lane.b32.xlu0 %v275, 24
        %v816 = vpop.permute.xlu0 %815
        %817 = vrot.lane.b32.xlu0 %v353, 24
        %v818 = vpop.permute.xlu0 %817
        %819 = vrot.lane.b32.xlu0 %v278, 24
        %v820 = vpop.permute.xlu0 %819
        %821 = vrot.lane.b32.xlu0 %v354, 24
        %v822 = vpop.permute.xlu0 %821
        %823 = vrot.lane.b32.xlu0 %v281, 24
        %v824 = vpop.permute.xlu0 %823
        %825 = vrot.lane.b32.xlu0 %v355, 24
        %v826 = vpop.permute.xlu0 %825
        %827 = vrot.lane.b32.xlu0 %v284, 24
        %v828 = vpop.permute.xlu0 %827
        %829 = vrot.lane.b32.xlu0 %v356, 24
        %v830 = vpop.permute.xlu0 %829
        %831 = vrot.lane.b32.xlu0 %v287, 24
        %v832 = vpop.permute.xlu0 %831
        %833 = vrot.lane.b32.xlu0 %v357, 24
        %v834 = vpop.permute.xlu0 %833
        %835 = vrot.lane.b32.xlu0 %v290, 24
        %v836 = vpop.permute.xlu0 %835
        %869 = vrot.lane.b32.xlu0 %v415, 32
        %v870 = vpop.permute.xlu0 %869
        %871 = vrot.lane.b32.xlu0 %v417, 32
        %v872 = vpop.permute.xlu0 %871
        %873 = vrot.lane.b32.xlu0 %v420, 32
        %v874 = vpop.permute.xlu0 %873
        %875 = vrot.lane.b32.xlu0 %v422, 32
        %v876 = vpop.permute.xlu0 %875
        %877 = vrot.lane.b32.xlu0 %v425, 32
        %v878 = vpop.permute.xlu0 %877
        %879 = vrot.lane.b32.xlu0 %v427, 32
        %v880 = vpop.permute.xlu0 %879
        %881 = vrot.lane.b32.xlu0 %v430, 32
        %v882 = vpop.permute.xlu0 %881
        %883 = vrot.lane.b32.xlu0 %v432, 32
        %v884 = vpop.permute.xlu0 %883
        %885 = vrot.lane.b32.xlu0 %v435, 32
        %v886 = vpop.permute.xlu0 %885
        %887 = vrot.lane.b32.xlu0 %v437, 32
        %v888 = vpop.permute.xlu0 %887
        %889 = vrot.lane.b32.xlu0 %v440, 32
        %v890 = vpop.permute.xlu0 %889
        %891 = vrot.lane.b32.xlu0 %v442, 32
        %v892 = vpop.permute.xlu0 %891
        %893 = vrot.lane.b32.xlu0 %v445, 32
        %v894 = vpop.permute.xlu0 %893
        %895 = vrot.lane.b32.xlu0 %v447, 32
        %v896 = vpop.permute.xlu0 %895
        %897 = vrot.lane.b32.xlu0 %v450, 32
        %v898 = vpop.permute.xlu0 %897
        %899 = vrot.lane.b32.xlu0 %v452, 32
        %v900 = vpop.permute.xlu0 %899
        %901 = vrot.lane.b32.xlu0 %v455, 32
        %v902 = vpop.permute.xlu0 %901
        %903 = vrot.lane.b32.xlu0 %v457, 32
        %v904 = vpop.permute.xlu0 %903
        %905 = vrot.lane.b32.xlu0 %v460, 32
        %v906 = vpop.permute.xlu0 %905
        %907 = vrot.lane.b32.xlu0 %v462, 32
        %v908 = vpop.permute.xlu0 %907
        %909 = vrot.lane.b32.xlu0 %v465, 32
        %v910 = vpop.permute.xlu0 %909
        %911 = vrot.lane.b32.xlu0 %v467, 32
        %v912 = vpop.permute.xlu0 %911
        %913 = vrot.lane.b32.xlu0 %v470, 32
        %v914 = vpop.permute.xlu0 %913
        %915 = vrot.lane.b32.xlu0 %v472, 32
        %v916 = vpop.permute.xlu0 %915
        %917 = vrot.lane.b32.xlu0 %v475, 32
        %v918 = vpop.permute.xlu0 %917
        %919 = vrot.lane.b32.xlu0 %v477, 32
        %v920 = vpop.permute.xlu0 %919
        %921 = vrot.lane.b32.xlu0 %v480, 32
        %v922 = vpop.permute.xlu0 %921
        %923 = vrot.lane.b32.xlu0 %v482, 32
        %v924 = vpop.permute.xlu0 %923
        %925 = vrot.lane.b32.xlu0 %v485, 32
        %v926 = vpop.permute.xlu0 %925
        %927 = vrot.lane.b32.xlu0 %v487, 32
        %v928 = vpop.permute.xlu0 %927
        %929 = vrot.lane.b32.xlu0 %v573, 32
        %v930 = vpop.permute.xlu0 %929
        %931 = vrot.lane.b32.xlu0 %v575, 32
        %v932 = vpop.permute.xlu0 %931
        %965 = vrot.lane.b32.xlu0 %v496, 40
        %v966 = vpop.permute.xlu0 %965
        %967 = vrot.lane.b32.xlu0 %v498, 40
        %v968 = vpop.permute.xlu0 %967
        %969 = vrot.lane.b32.xlu0 %v501, 40
        %v970 = vpop.permute.xlu0 %969
        %971 = vrot.lane.b32.xlu0 %v503, 40
        %v972 = vpop.permute.xlu0 %971
        %973 = vrot.lane.b32.xlu0 %v506, 40
        %v974 = vpop.permute.xlu0 %973
        %975 = vrot.lane.b32.xlu0 %v508, 40
        %v976 = vpop.permute.xlu0 %975
        %977 = vrot.lane.b32.xlu0 %v511, 40
        %v978 = vpop.permute.xlu0 %977
        %979 = vrot.lane.b32.xlu0 %v513, 40
        %v980 = vpop.permute.xlu0 %979
        %981 = vrot.lane.b32.xlu0 %v516, 40
        %v982 = vpop.permute.xlu0 %981
        %983 = vrot.lane.b32.xlu0 %v518, 40
        %v984 = vpop.permute.xlu0 %983
        %985 = vrot.lane.b32.xlu0 %v521, 40
        %v986 = vpop.permute.xlu0 %985
        %987 = vrot.lane.b32.xlu0 %v523, 40
        %v988 = vpop.permute.xlu0 %987
        %989 = vrot.lane.b32.xlu0 %v526, 40
        %v990 = vpop.permute.xlu0 %989
        %991 = vrot.lane.b32.xlu0 %v528, 40
        %v992 = vpop.permute.xlu0 %991
        %993 = vrot.lane.b32.xlu0 %v531, 40
        %v994 = vpop.permute.xlu0 %993
        %995 = vrot.lane.b32.xlu0 %v533, 40
        %v996 = vpop.permute.xlu0 %995
        %997 = vrot.lane.b32.xlu0 %v536, 40
        %v998 = vpop.permute.xlu0 %997
        %999 = vrot.lane.b32.xlu0 %v538, 40
        %v1000 = vpop.permute.xlu0 %999
        %1001 = vrot.lane.b32.xlu0 %v541, 40
        %v1002 = vpop.permute.xlu0 %1001
        %1003 = vrot.lane.b32.xlu0 %v543, 40
        %v1004 = vpop.permute.xlu0 %1003
        %1005 = vrot.lane.b32.xlu0 %v546, 40
        %v1006 = vpop.permute.xlu0 %1005
        %1007 = vrot.lane.b32.xlu0 %v548, 40
        %v1008 = vpop.permute.xlu0 %1007
        %1009 = vrot.lane.b32.xlu0 %v551, 40
        %v1010 = vpop.permute.xlu0 %1009
        %1011 = vrot.lane.b32.xlu0 %v553, 40
        %v1012 = vpop.permute.xlu0 %1011
        %1013 = vrot.lane.b32.xlu0 %v556, 40
        %v1014 = vpop.permute.xlu0 %1013
        %1015 = vrot.lane.b32.xlu0 %v558, 40
        %v1016 = vpop.permute.xlu0 %1015
        %1017 = vrot.lane.b32.xlu0 %v561, 40
        %v1018 = vpop.permute.xlu0 %1017
        %1019 = vrot.lane.b32.xlu0 %v563, 40
        %v1020 = vpop.permute.xlu0 %1019
        %1021 = vrot.lane.b32.xlu0 %v566, 40
        %v1022 = vpop.permute.xlu0 %1021
        %1023 = vrot.lane.b32.xlu0 %v568, 40
        %v1024 = vpop.permute.xlu0 %1023
        %1025 = vrot.lane.b32.xlu0 %v578, 40
        %v1026 = vpop.permute.xlu0 %1025
        %1027 = vrot.lane.b32.xlu0 %v580, 40
        %v1028 = vpop.permute.xlu0 %1027
        %vm1061 = vcmask 64512
        %v1062 = vsel %vm1061, %v341, %v582
        %v1063 = vsel %vm1061, %v242, %v584
        %v1064 = vsel %vm1061, %v342, %v586
        %v1065 = vsel %vm1061, %v245, %v588
        %v1066 = vsel %vm1061, %v343, %v590
        %v1067 = vsel %vm1061, %v248, %v592
        %v1068 = vsel %vm1061, %v344, %v594
        %v1069 = vsel %vm1061, %v251, %v596
        %v1070 = vsel %vm1061, %v345, %v598
        %v1071 = vsel %vm1061, %v254, %v600
        %v1072 = vsel %vm1061, %v346, %v602
        %v1073 = vsel %vm1061, %v257, %v604
        %v1074 = vsel %vm1061, %v347, %v606
        %v1075 = vsel %vm1061, %v260, %v608
        %v1076 = vsel %vm1061, %v348, %v610
        %v1077 = vsel %vm1061, %v263, %v612
        %v1078 = vsel %vm1061, %v349, %v614
        %v1079 = vsel %vm1061, %v266, %v616
        %v1080 = vsel %vm1061, %v350, %v618
        %v1081 = vsel %vm1061, %v269, %v620
        %v1082 = vsel %vm1061, %v351, %v622
        %v1083 = vsel %vm1061, %v272, %v624
        %v1084 = vsel %vm1061, %v352, %v626
        %v1085 = vsel %vm1061, %v275, %v628
        %v1086 = vsel %vm1061, %v353, %v630
        %v1087 = vsel %vm1061, %v278, %v632
        %v1088 = vsel %vm1061, %v354, %v634
        %v1089 = vsel %vm1061, %v281, %v636
        %v1090 = vsel %vm1061, %v355, %v638
        %v1091 = vsel %vm1061, %v284, %v640
        %v1092 = vsel %vm1061, %v356, %v642
        %v1093 = vsel %vm1061, %v287, %v644
        %vm1094 = vcmask 130048
        %v1095 = vsel %vm1094, %v1062, %v678
        %v1096 = vsel %vm1094, %v1063, %v680
        %v1097 = vsel %vm1094, %v1064, %v682
        %v1098 = vsel %vm1094, %v1065, %v684
        %v1099 = vsel %vm1094, %v1066, %v686
        %v1100 = vsel %vm1094, %v1067, %v688
        %v1101 = vsel %vm1094, %v1068, %v690
        %v1102 = vsel %vm1094, %v1069, %v692
        %v1103 = vsel %vm1094, %v1070, %v694
        %v1104 = vsel %vm1094, %v1071, %v696
        %v1105 = vsel %vm1094, %v1072, %v698
        %v1106 = vsel %vm1094, %v1073, %v700
        %v1107 = vsel %vm1094, %v1074, %v702
        %v1108 = vsel %vm1094, %v1075, %v704
        %v1109 = vsel %vm1094, %v1076, %v706
        %v1110 = vsel %vm1094, %v1077, %v708
        %v1111 = vsel %vm1094, %v1078, %v710
        %v1112 = vsel %vm1094, %v1079, %v712
        %v1113 = vsel %vm1094, %v1080, %v714
        %v1114 = vsel %vm1094, %v1081, %v716
        %v1115 = vsel %vm1094, %v1082, %v718
        %v1116 = vsel %vm1094, %v1083, %v720
        %v1117 = vsel %vm1094, %v1084, %v722
        %v1118 = vsel %vm1094, %v1085, %v724
        %v1119 = vsel %vm1094, %v1086, %v726
        %v1120 = vsel %vm1094, %v1087, %v728
        %v1121 = vsel %vm1094, %v1088, %v730
        %v1122 = vsel %vm1094, %v1089, %v732
        %v1123 = vsel %vm1094, %v1090, %v734
        %v1124 = vsel %vm1094, %v1091, %v736
        %v1125 = vsel %vm1094, %v1092, %v738
        %v1126 = vsel %vm1094, %v1093, %v740
        %vm1127 = vcmask 195584
        %v1128 = vsel %vm1127, %v1095, %v774
        %v1129 = vsel %vm1127, %v1096, %v776
        %v1130 = vsel %vm1127, %v1097, %v778
        %v1131 = vsel %vm1127, %v1098, %v780
        %v1132 = vsel %vm1127, %v1099, %v782
        %v1133 = vsel %vm1127, %v1100, %v784
        %v1134 = vsel %vm1127, %v1101, %v786
        %v1135 = vsel %vm1127, %v1102, %v788
        %v1136 = vsel %vm1127, %v1103, %v790
        %v1137 = vsel %vm1127, %v1104, %v792
        %v1138 = vsel %vm1127, %v1105, %v794
        %v1139 = vsel %vm1127, %v1106, %v796
        %v1140 = vsel %vm1127, %v1107, %v798
        %v1141 = vsel %vm1127, %v1108, %v800
        %v1142 = vsel %vm1127, %v1109, %v802
        %v1143 = vsel %vm1127, %v1110, %v804
        %v1144 = vsel %vm1127, %v1111, %v806
        %v1145 = vsel %vm1127, %v1112, %v808
        %v1146 = vsel %vm1127, %v1113, %v810
        %v1147 = vsel %vm1127, %v1114, %v812
        %v1148 = vsel %vm1127, %v1115, %v814
        %v1149 = vsel %vm1127, %v1116, %v816
        %v1150 = vsel %vm1127, %v1117, %v818
        %v1151 = vsel %vm1127, %v1118, %v820
        %v1152 = vsel %vm1127, %v1119, %v822
        %v1153 = vsel %vm1127, %v1120, %v824
        %v1154 = vsel %vm1127, %v1121, %v826
        %v1155 = vsel %vm1127, %v1122, %v828
        %v1156 = vsel %vm1127, %v1123, %v830
        %v1157 = vsel %vm1127, %v1124, %v832
        %v1158 = vsel %vm1127, %v1125, %v834
        %v1159 = vsel %vm1127, %v1126, %v836
        %vm1160 = vcmask 261120
        %v1161 = vsel %vm1160, %v1128, %v870
        %v1162 = vsel %vm1160, %v1129, %v872
        %v1163 = vsel %vm1160, %v1130, %v874
        %v1164 = vsel %vm1160, %v1131, %v876
        %v1165 = vsel %vm1160, %v1132, %v878
        %v1166 = vsel %vm1160, %v1133, %v880
        %v1167 = vsel %vm1160, %v1134, %v882
        %v1168 = vsel %vm1160, %v1135, %v884
        %v1169 = vsel %vm1160, %v1136, %v886
        %v1170 = vsel %vm1160, %v1137, %v888
        %v1171 = vsel %vm1160, %v1138, %v890
        %v1172 = vsel %vm1160, %v1139, %v892
        %v1173 = vsel %vm1160, %v1140, %v894
        %v1174 = vsel %vm1160, %v1141, %v896
        %v1175 = vsel %vm1160, %v1142, %v898
        %v1176 = vsel %vm1160, %v1143, %v900
        %v1177 = vsel %vm1160, %v1144, %v902
        %v1178 = vsel %vm1160, %v1145, %v904
        %v1179 = vsel %vm1160, %v1146, %v906
        %v1180 = vsel %vm1160, %v1147, %v908
        %v1181 = vsel %vm1160, %v1148, %v910
        %v1182 = vsel %vm1160, %v1149, %v912
        %v1183 = vsel %vm1160, %v1150, %v914
        %v1184 = vsel %vm1160, %v1151, %v916
        %v1185 = vsel %vm1160, %v1152, %v918
        %v1186 = vsel %vm1160, %v1153, %v920
        %v1187 = vsel %vm1160, %v1154, %v922
        %v1188 = vsel %vm1160, %v1155, %v924
        %v1189 = vsel %vm1160, %v1156, %v926
        %v1190 = vsel %vm1160, %v1157, %v928
        %v1191 = vsel %vm1160, %v1158, %v930
        %v1192 = vsel %vm1160, %v1159, %v932
        %vm1193 = vcmask 326656
        %v1194 = vsel %vm1193, %v1161, %v966
        %v1195 = vsel %vm1193, %v1162, %v968
        %v1196 = vsel %vm1193, %v1163, %v970
        %v1197 = vsel %vm1193, %v1164, %v972
        %v1198 = vsel %vm1193, %v1165, %v974
        %v1199 = vsel %vm1193, %v1166, %v976
        %v1200 = vsel %vm1193, %v1167, %v978
        %v1201 = vsel %vm1193, %v1168, %v980
        %v1202 = vsel %vm1193, %v1169, %v982
        %v1203 = vsel %vm1193, %v1170, %v984
        %v1204 = vsel %vm1193, %v1171, %v986
        %v1205 = vsel %vm1193, %v1172, %v988
        %v1206 = vsel %vm1193, %v1173, %v990
        %v1207 = vsel %vm1193, %v1174, %v992
        %v1208 = vsel %vm1193, %v1175, %v994
        %v1209 = vsel %vm1193, %v1176, %v996
        %v1210 = vsel %vm1193, %v1177, %v998
        %v1211 = vsel %vm1193, %v1178, %v1000
        %v1212 = vsel %vm1193, %v1179, %v1002
        %v1213 = vsel %vm1193, %v1180, %v1004
        %v1214 = vsel %vm1193, %v1181, %v1006
        %v1215 = vsel %vm1193, %v1182, %v1008
        %v1216 = vsel %vm1193, %v1183, %v1010
        %v1217 = vsel %vm1193, %v1184, %v1012
        %v1218 = vsel %vm1193, %v1185, %v1014
        %v1219 = vsel %vm1193, %v1186, %v1016
        %v1220 = vsel %vm1193, %v1187, %v1018
        %v1221 = vsel %vm1193, %v1188, %v1020
        %v1222 = vsel %vm1193, %v1189, %v1022
        %v1223 = vsel %vm1193, %v1190, %v1024
        %v1224 = vsel %vm1193, %v1191, %v1026
        %v1225 = vsel %vm1193, %v1192, %v1028
        %v1226 = vpack.c.bf16 %v1195, %v1194
        %v1227 = vpack.c.bf16 %v1197, %v1196
        %v1228 = vpack.c.bf16 %v1199, %v1198
        %v1229 = vpack.c.bf16 %v1201, %v1200
        %v1230 = vpack.c.bf16 %v1203, %v1202
        %v1231 = vpack.c.bf16 %v1205, %v1204
        %v1232 = vpack.c.bf16 %v1207, %v1206
        %v1233 = vpack.c.bf16 %v1209, %v1208
        %v1234 = vpack.c.bf16 %v1211, %v1210
        %v1235 = vpack.c.bf16 %v1213, %v1212
        %v1236 = vpack.c.bf16 %v1215, %v1214
        %v1237 = vpack.c.bf16 %v1217, %v1216
        %v1238 = vpack.c.bf16 %v1219, %v1218
        %v1239 = vpack.c.bf16 %v1221, %v1220
        %v1240 = vpack.c.bf16 %v1223, %v1222
        %v1241 = vpack.c.bf16 %v1225, %v1224
        %v1242 = vld [vmem:[%s1] sm:$0xf]
        %v1243 = vld [vmem:[%s1 + $0x4] sm:$0xf]
        %v1244 = vld [vmem:[%s1 + $0x8] sm:$0xf]
        %v1245 = vld [vmem:[%s1 + $0xc] sm:$0xf]
        %v1246 = vld [vmem:[%s1 + $0x10] sm:$0xf]
        %v1247 = vld [vmem:[%s1 + $0x14] sm:$0xf]
        %v1254 = vunpack.c.l.b16 %v1242
        %v1255 = vunpack.c.l.b16 %v1243
        %v1256 = vunpack.c.l.b16 %v1244
        %v1257 = vunpack.c.l.b16 %v1245
        %v1258 = vunpack.c.l.b16 %v1246
        %v1259 = vunpack.c.l.b16 %v1247
        %v1260 = vpack.c.b16 %v1255, %v1254
        %v1261 = vpack.c.b16 %v1257, %v1256
        %v1262 = vpack.c.b16 %v1259, %v1258
        %vm1266 = vcmask 392192
        %v1268 = vsel %vm1266, %v1226, 0
        %v1271 = vsel %vm1266, %v1227, 0
        %v1274 = vsel %vm1266, %v1228, 0
        %v1277 = vsel %vm1266, %v1229, 0
        %v1280 = vsel %vm1266, %v1230, 0
        %v1283 = vsel %vm1266, %v1231, 0
        %v1286 = vsel %vm1266, %v1232, 0
        %v1289 = vsel %vm1266, %v1233, 0
        %v1292 = vsel %vm1266, %v1234, 0
        %v1295 = vsel %vm1266, %v1235, 0
        %v1298 = vsel %vm1266, %v1236, 0
        %v1301 = vsel %vm1266, %v1237, 0
        %v1304 = vsel %vm1266, %v1238, 0
        %v1307 = vsel %vm1266, %v1239, 0
        %v1310 = vsel %vm1266, %v1240, 0
        %v1313 = vsel %vm1266, %v1241, 0
        %1315 = vmatprep.subr.bf16.mxu0 0
        %1316 = vmatpush1.bf16.msra.mxu0 %v1260
        %1317 = vmatprep.subr.bf16.mxu0 0
        %1318 = vmatpush1.bf16.msra.mxu0 %v1261
        %1319 = vmatprep.subr.bf16.mxu0 0
        %1320 = vmatpush1.bf16.msra.mxu0 %v1262
        %1321 = vmatprep.subr.bf16.mxu0 0
        %1322 = vmatpush1.bf16.msra.mxu0 0
        %1323 = vmatprep.subr.bf16.mxu0 0
        %1324 = vmatpush1.bf16.msra.mxu0 0
        %1325 = vmatprep.subr.bf16.mxu0 0
        %1326 = vmatpush1.bf16.msra.mxu0 0
        %1327 = vmatprep.subr.bf16.mxu0 0
        %1328 = vmatpush1.bf16.msra.mxu0 0
        %1329 = vmatprep.subr.bf16.mxu0 0
        %1330 = vmatpush1.bf16.msra.mxu0 0
        %1331 = vmatprep.subr.bf16.mxu0 0
        %1332 = vmatpush1.bf16.msra.mxu0 0
        %1333 = vmatprep.subr.bf16.mxu0 0
        %1334 = vmatpush1.bf16.msra.mxu0 0
        %1335 = vmatprep.subr.bf16.mxu0 0
        %1336 = vmatpush1.bf16.msra.mxu0 0
        %1337 = vmatprep.subr.bf16.mxu0 0
        %1338 = vmatpush1.bf16.msra.mxu0 0
        %1339 = vmatprep.subr.bf16.mxu0 0
        %1340 = vmatpush1.bf16.msra.mxu0 0
        %1341 = vmatprep.subr.bf16.mxu0 0
        %1342 = vmatpush1.bf16.msra.mxu0 0
        %1343 = vmatprep.subr.bf16.mxu0 0
        %1344 = vmatpush1.bf16.msra.mxu0 0
        %1345 = vmatprep.subr.bf16.mxu0 0
        %1346 = vmatpush1.bf16.msra.mxu0 0
        %1347 = vmatprep.mubr.bf16.mxu0 0
        %1348 = vmatmul.mubr.bf16.gmra.mrb[0].mxu0 %v1268
        %v1349 = vpop.f32.mrb[0].mxu0
        %v1350 = vadd.f32 0.0, %v1349
        %v1351 = vpop.f32.mrb[0].mxu0
        %v1352 = vpop.f32.mrb[0].mxu0
        %v1353 = vadd.f32 0.0, %v1352
        %v1354 = vpop.f32.mrb[0].mxu0
        %1355 = vmatprep.mubr.bf16.mxu0 0
        %1356 = vmatmul.mubr.bf16.gmra.mrb[0].mxu0 %v1271
        %v1357 = vpop.f32.mrb[0].mxu0
        %v1358 = vadd.f32 0.0, %v1357
        %v1359 = vpop.f32.mrb[0].mxu0
        %v1360 = vpop.f32.mrb[0].mxu0
        %v1361 = vadd.f32 0.0, %v1360
        %v1362 = vpop.f32.mrb[0].mxu0
        %1363 = vmatprep.mubr.bf16.mxu0 0
        %1364 = vmatmul.mubr.bf16.gmra.mrb[0].mxu0 %v1274
        %v1365 = vpop.f32.mrb[0].mxu0
        %v1366 = vadd.f32 0.0, %v1365
        %v1367 = vpop.f32.mrb[0].mxu0
        %v1368 = vpop.f32.mrb[0].mxu0
        %v1369 = vadd.f32 0.0, %v1368
        %v1370 = vpop.f32.mrb[0].mxu0
        %1371 = vmatprep.mubr.bf16.mxu0 0
        %1372 = vmatmul.mubr.bf16.gmra.mrb[0].mxu0 %v1277
        %v1373 = vpop.f32.mrb[0].mxu0
        %v1374 = vadd.f32 0.0, %v1373
        %v1375 = vpop.f32.mrb[0].mxu0
        %v1376 = vpop.f32.mrb[0].mxu0
        %v1377 = vadd.f32 0.0, %v1376
        %v1378 = vpop.f32.mrb[0].mxu0
        %1379 = vmatprep.mubr.bf16.mxu0 0
        %1380 = vmatmul.mubr.bf16.gmra.mrb[0].mxu0 %v1280
        %v1381 = vpop.f32.mrb[0].mxu0
        %v1382 = vadd.f32 0.0, %v1381
        %v1383 = vpop.f32.mrb[0].mxu0
        %v1384 = vpop.f32.mrb[0].mxu0
        %v1385 = vadd.f32 0.0, %v1384
        %v1386 = vpop.f32.mrb[0].mxu0
        %1387 = vmatprep.mubr.bf16.mxu0 0
        %1388 = vmatmul.mubr.bf16.gmra.mrb[0].mxu0 %v1283
        %v1389 = vpop.f32.mrb[0].mxu0
        %v1390 = vadd.f32 0.0, %v1389
        %v1391 = vpop.f32.mrb[0].mxu0
        %v1392 = vpop.f32.mrb[0].mxu0
        %v1393 = vadd.f32 0.0, %v1392
        %v1394 = vpop.f32.mrb[0].mxu0
        %1395 = vmatprep.mubr.bf16.mxu0 0
        %1396 = vmatmul.mubr.bf16.gmra.mrb[0].mxu0 %v1286
        %v1397 = vpop.f32.mrb[0].mxu0
        %v1398 = vadd.f32 0.0, %v1397
        %v1399 = vpop.f32.mrb[0].mxu0
        %v1400 = vpop.f32.mrb[0].mxu0
        %v1401 = vadd.f32 0.0, %v1400
        %v1402 = vpop.f32.mrb[0].mxu0
        %1403 = vmatprep.mubr.bf16.mxu0 0
        %1404 = vmatmul.mubr.bf16.gmra.mrb[0].mxu0 %v1289
        %v1405 = vpop.f32.mrb[0].mxu0
        %v1406 = vadd.f32 0.0, %v1405
        %v1407 = vpop.f32.mrb[0].mxu0
        %v1408 = vpop.f32.mrb[0].mxu0
        %v1409 = vadd.f32 0.0, %v1408
        %v1410 = vpop.f32.mrb[0].mxu0
        %1411 = vmatprep.mubr.bf16.mxu0 0
        %1412 = vmatmul.mubr.bf16.gmra.mrb[0].mxu0 %v1292
        %v1413 = vpop.f32.mrb[0].mxu0
        %v1414 = vadd.f32 0.0, %v1413
        %v1415 = vpop.f32.mrb[0].mxu0
        %v1416 = vpop.f32.mrb[0].mxu0
        %v1417 = vadd.f32 0.0, %v1416
        %v1418 = vpop.f32.mrb[0].mxu0
        %1419 = vmatprep.mubr.bf16.mxu0 0
        %1420 = vmatmul.mubr.bf16.gmra.mrb[0].mxu0 %v1295
        %v1421 = vpop.f32.mrb[0].mxu0
        %v1422 = vadd.f32 0.0, %v1421
        %v1423 = vpop.f32.mrb[0].mxu0
        %v1424 = vpop.f32.mrb[0].mxu0
        %v1425 = vadd.f32 0.0, %v1424
        %v1426 = vpop.f32.mrb[0].mxu0
        %1427 = vmatprep.mubr.bf16.mxu0 0
        %1428 = vmatmul.mubr.bf16.gmra.mrb[0].mxu0 %v1298
        %v1429 = vpop.f32.mrb[0].mxu0
        %v1430 = vadd.f32 0.0, %v1429
        %v1431 = vpop.f32.mrb[0].mxu0
        %v1432 = vpop.f32.mrb[0].mxu0
        %v1433 = vadd.f32 0.0, %v1432
        %v1434 = vpop.f32.mrb[0].mxu0
        %1435 = vmatprep.mubr.bf16.mxu0 0
        %1436 = vmatmul.mubr.bf16.gmra.mrb[0].mxu0 %v1301
        %v1437 = vpop.f32.mrb[0].mxu0
        %v1438 = vadd.f32 0.0, %v1437
        %v1439 = vpop.f32.mrb[0].mxu0
        %v1440 = vpop.f32.mrb[0].mxu0
        %v1441 = vadd.f32 0.0, %v1440
        %v1442 = vpop.f32.mrb[0].mxu0
        %1443 = vmatprep.mubr.bf16.mxu0 0
        %1444 = vmatmul.mubr.bf16.gmra.mrb[0].mxu0 %v1304
        %v1445 = vpop.f32.mrb[0].mxu0
        %v1446 = vadd.f32 0.0, %v1445
        %v1447 = vpop.f32.mrb[0].mxu0
        %v1448 = vpop.f32.mrb[0].mxu0
        %v1449 = vadd.f32 0.0, %v1448
        %v1450 = vpop.f32.mrb[0].mxu0
        %1451 = vmatprep.mubr.bf16.mxu0 0
        %1452 = vmatmul.mubr.bf16.gmra.mrb[0].mxu0 %v1307
        %v1453 = vpop.f32.mrb[0].mxu0
        %v1454 = vadd.f32 0.0, %v1453
        %v1455 = vpop.f32.mrb[0].mxu0
        %v1456 = vpop.f32.mrb[0].mxu0
        %v1457 = vadd.f32 0.0, %v1456
        %v1458 = vpop.f32.mrb[0].mxu0
        %1459 = vmatprep.mubr.bf16.mxu0 0
        %1460 = vmatmul.mubr.bf16.gmra.mrb[0].mxu0 %v1310
        %v1461 = vpop.f32.mrb[0].mxu0
        %v1462 = vadd.f32 0.0, %v1461
        %v1463 = vpop.f32.mrb[0].mxu0
        %v1464 = vpop.f32.mrb[0].mxu0
        %v1465 = vadd.f32 0.0, %v1464
        %v1466 = vpop.f32.mrb[0].mxu0
        %1467 = vmatprep.mubr.bf16.mxu0 0
        %1468 = vmatmul.mubr.bf16.gmra.mrb[0].mxu0 %v1313
        %v1469 = vpop.f32.mrb[0].mxu0
        %v1470 = vadd.f32 0.0, %v1469
        %v1471 = vpop.f32.mrb[0].mxu0
        %v1472 = vpop.f32.mrb[0].mxu0
        %v1473 = vadd.f32 0.0, %v1472
        %v1474 = vpop.f32.mrb[0].mxu0
        %1475 = vdwg.mxu0
        %1476 = vrot.lane.b32.xlu0 %v573, 8
        %v1477 = vpop.permute.xlu0 %1476
        %1478 = vrot.lane.b32.xlu0 %v575, 8
        %v1479 = vpop.permute.xlu0 %1478
        %1482 = vrot.lane.b32.xlu0 %v578, 16
        %v1483 = vpop.permute.xlu0 %1482
        %1484 = vrot.lane.b32.xlu0 %v580, 16
        %v1485 = vpop.permute.xlu0 %1484
        %1488 = vrot.lane.b32.xlu0 %v341, 24
        %v1489 = vpop.permute.xlu0 %1488
        %1490 = vrot.lane.b32.xlu0 %v242, 24
        %v1491 = vpop.permute.xlu0 %1490
        %1494 = vrot.lane.b32.xlu0 %v410, 32
        %v1495 = vpop.permute.xlu0 %1494
        %1496 = vrot.lane.b32.xlu0 %v412, 32
        %v1497 = vpop.permute.xlu0 %1496
        %1500 = vrot.lane.b32.xlu0 %v491, 40
        %v1501 = vpop.permute.xlu0 %1500
        %1502 = vrot.lane.b32.xlu0 %v493, 40
        %v1503 = vpop.permute.xlu0 %1502
        %v1506 = vsel %vm1061, %v357, %v1477
        %v1507 = vsel %vm1061, %v290, %v1479
        %v1508 = vsel %vm1094, %v1506, %v1483
        %v1509 = vsel %vm1094, %v1507, %v1485
        %v1510 = vsel %vm1127, %v1508, %v1489
        %v1511 = vsel %vm1127, %v1509, %v1491
        %v1512 = vsel %vm1160, %v1510, %v1495
        %v1513 = vsel %vm1160, %v1511, %v1497
        %v1514 = vsel %vm1193, %v1512, %v1501
        %v1515 = vsel %vm1193, %v1513, %v1503
        %v1516 = vpack.c.bf16 %v1515, %v1514
        %s1517 = scalar_lea.vmem %s1, 24
        %v1518 = vld [vmem:[%s1517] sm:$0xf]
        %v1519 = vld [vmem:[%s1517 + $0x4] sm:$0xf]
        %v1520 = vld [vmem:[%s1517 + $0x8] sm:$0xf]
        %v1521 = vld [vmem:[%s1517 + $0xc] sm:$0xf]
        %v1522 = vld [vmem:[%s1517 + $0x10] sm:$0xf]
        %v1523 = vld [vmem:[%s1517 + $0x14] sm:$0xf]
        %v1530 = vunpack.c.l.b16 %v1518
        %v1531 = vunpack.c.l.b16 %v1519
        %v1532 = vunpack.c.l.b16 %v1520
        %v1533 = vunpack.c.l.b16 %v1521
        %v1534 = vunpack.c.l.b16 %v1522
        %v1535 = vunpack.c.l.b16 %v1523
        %v1536 = vpack.c.b16 %v1531, %v1530
        %v1537 = vpack.c.b16 %v1533, %v1532
        %v1538 = vpack.c.b16 %v1535, %v1534
        %v1543 = vsel %vm1266, %v1516, 0
        %1545 = vmatprep.subr.bf16.mxu0 0
        %1546 = vmatpush1.bf16.msra.mxu0 %v1536
        %1547 = vmatprep.subr.bf16.mxu0 0
        %1548 = vmatpush1.bf16.msra.mxu0 %v1537
        %1549 = vmatprep.subr.bf16.mxu0 0
        %1550 = vmatpush1.bf16.msra.mxu0 %v1538
        %1551 = vmatprep.subr.bf16.mxu0 0
        %1552 = vmatpush1.bf16.msra.mxu0 0
        %1553 = vmatprep.subr.bf16.mxu0 0
        %1554 = vmatpush1.bf16.msra.mxu0 0
        %1555 = vmatprep.subr.bf16.mxu0 0
        %1556 = vmatpush1.bf16.msra.mxu0 0
        %1557 = vmatprep.subr.bf16.mxu0 0
        %1558 = vmatpush1.bf16.msra.mxu0 0
        %1559 = vmatprep.subr.bf16.mxu0 0
        %1560 = vmatpush1.bf16.msra.mxu0 0
        %1561 = vmatprep.subr.bf16.mxu0 0
        %1562 = vmatpush1.bf16.msra.mxu0 0
        %1563 = vmatprep.subr.bf16.mxu0 0
        %1564 = vmatpush1.bf16.msra.mxu0 0
        %1565 = vmatprep.subr.bf16.mxu0 0
        %1566 = vmatpush1.bf16.msra.mxu0 0
        %1567 = vmatprep.subr.bf16.mxu0 0
        %1568 = vmatpush1.bf16.msra.mxu0 0
        %1569 = vmatprep.subr.bf16.mxu0 0
        %1570 = vmatpush1.bf16.msra.mxu0 0
        %1571 = vmatprep.subr.bf16.mxu0 0
        %1572 = vmatpush1.bf16.msra.mxu0 0
        %1573 = vmatprep.subr.bf16.mxu0 0
        %1574 = vmatpush1.bf16.msra.mxu0 0
        %1575 = vmatprep.subr.bf16.mxu0 0
        %1576 = vmatpush1.bf16.msra.mxu0 0
        %1577 = vmatprep.mubr.bf16.mxu0 0
        %1578 = vmatmul.mubr.bf16.gmra.mrb[0].mxu0 %v1271
        %v1579 = vpop.f32.mrb[0].mxu0
        %v1580 = vadd.f32 0.0, %v1579
        %v1581 = vpop.f32.mrb[0].mxu0
        %v1582 = vpop.f32.mrb[0].mxu0
        %v1583 = vadd.f32 0.0, %v1582
        %v1584 = vpop.f32.mrb[0].mxu0
        %1585 = vmatprep.mubr.bf16.mxu0 0
        %1586 = vmatmul.mubr.bf16.gmra.mrb[0].mxu0 %v1274
        %v1587 = vpop.f32.mrb[0].mxu0
        %v1588 = vadd.f32 0.0, %v1587
        %v1589 = vpop.f32.mrb[0].mxu0
        %v1590 = vpop.f32.mrb[0].mxu0
        %v1591 = vadd.f32 0.0, %v1590
        %v1592 = vpop.f32.mrb[0].mxu0
        %1593 = vmatprep.mubr.bf16.mxu0 0
        %1594 = vmatmul.mubr.bf16.gmra.mrb[0].mxu0 %v1277
        %v1595 = vpop.f32.mrb[0].mxu0
        %v1596 = vadd.f32 0.0, %v1595
        %v1597 = vpop.f32.mrb[0].mxu0
        %v1598 = vpop.f32.mrb[0].mxu0
        %v1599 = vadd.f32 0.0, %v1598
        %v1600 = vpop.f32.mrb[0].mxu0
        %1601 = vmatprep.mubr.bf16.mxu0 0
        %1602 = vmatmul.mubr.bf16.gmra.mrb[0].mxu0 %v1280
        %v1603 = vpop.f32.mrb[0].mxu0
        %v1604 = vadd.f32 0.0, %v1603
        %v1605 = vpop.f32.mrb[0].mxu0
        %v1606 = vpop.f32.mrb[0].mxu0
        %v1607 = vadd.f32 0.0, %v1606
        %v1608 = vpop.f32.mrb[0].mxu0
        %1609 = vmatprep.mubr.bf16.mxu0 0
        %1610 = vmatmul.mubr.bf16.gmra.mrb[0].mxu0 %v1283
        %v1611 = vpop.f32.mrb[0].mxu0
        %v1612 = vadd.f32 0.0, %v1611
        %v1613 = vpop.f32.mrb[0].mxu0
        %v1614 = vpop.f32.mrb[0].mxu0
        %v1615 = vadd.f32 0.0, %v1614
        %v1616 = vpop.f32.mrb[0].mxu0
        %1617 = vmatprep.mubr.bf16.mxu0 0
        %1618 = vmatmul.mubr.bf16.gmra.mrb[0].mxu0 %v1286
        %v1619 = vpop.f32.mrb[0].mxu0
        %v1620 = vadd.f32 0.0, %v1619
        %v1621 = vpop.f32.mrb[0].mxu0
        %v1622 = vpop.f32.mrb[0].mxu0
        %v1623 = vadd.f32 0.0, %v1622
        %v1624 = vpop.f32.mrb[0].mxu0
        %1625 = vmatprep.mubr.bf16.mxu0 0
        %1626 = vmatmul.mubr.bf16.gmra.mrb[0].mxu0 %v1289
        %v1627 = vpop.f32.mrb[0].mxu0
        %v1628 = vadd.f32 0.0, %v1627
        %v1629 = vpop.f32.mrb[0].mxu0
        %v1630 = vpop.f32.mrb[0].mxu0
        %v1631 = vadd.f32 0.0, %v1630
        %v1632 = vpop.f32.mrb[0].mxu0
        %1633 = vmatprep.mubr.bf16.mxu0 0
        %1634 = vmatmul.mubr.bf16.gmra.mrb[0].mxu0 %v1292
        %v1635 = vpop.f32.mrb[0].mxu0
        %v1636 = vadd.f32 0.0, %v1635
        %v1637 = vpop.f32.mrb[0].mxu0
        %v1638 = vpop.f32.mrb[0].mxu0
        %v1639 = vadd.f32 0.0, %v1638
        %v1640 = vpop.f32.mrb[0].mxu0
        %1641 = vmatprep.mubr.bf16.mxu0 0
        %1642 = vmatmul.mubr.bf16.gmra.mrb[0].mxu0 %v1295
        %v1643 = vpop.f32.mrb[0].mxu0
        %v1644 = vadd.f32 0.0, %v1643
        %v1645 = vpop.f32.mrb[0].mxu0
        %v1646 = vpop.f32.mrb[0].mxu0
        %v1647 = vadd.f32 0.0, %v1646
        %v1648 = vpop.f32.mrb[0].mxu0
        %1649 = vmatprep.mubr.bf16.mxu0 0
        %1650 = vmatmul.mubr.bf16.gmra.mrb[0].mxu0 %v1298
        %v1651 = vpop.f32.mrb[0].mxu0
        %v1652 = vadd.f32 0.0, %v1651
        %v1653 = vpop.f32.mrb[0].mxu0
        %v1654 = vpop.f32.mrb[0].mxu0
        %v1655 = vadd.f32 0.0, %v1654
        %v1656 = vpop.f32.mrb[0].mxu0
        %1657 = vmatprep.mubr.bf16.mxu0 0
        %1658 = vmatmul.mubr.bf16.gmra.mrb[0].mxu0 %v1301
        %v1659 = vpop.f32.mrb[0].mxu0
        %v1660 = vadd.f32 0.0, %v1659
        %v1661 = vpop.f32.mrb[0].mxu0
        %v1662 = vpop.f32.mrb[0].mxu0
        %v1663 = vadd.f32 0.0, %v1662
        %v1664 = vpop.f32.mrb[0].mxu0
        %1665 = vmatprep.mubr.bf16.mxu0 0
        %1666 = vmatmul.mubr.bf16.gmra.mrb[0].mxu0 %v1304
        %v1667 = vpop.f32.mrb[0].mxu0
        %v1668 = vadd.f32 0.0, %v1667
        %v1669 = vpop.f32.mrb[0].mxu0
        %v1670 = vpop.f32.mrb[0].mxu0
        %v1671 = vadd.f32 0.0, %v1670
        %v1672 = vpop.f32.mrb[0].mxu0
        %1673 = vmatprep.mubr.bf16.mxu0 0
        %1674 = vmatmul.mubr.bf16.gmra.mrb[0].mxu0 %v1307
        %v1675 = vpop.f32.mrb[0].mxu0
        %v1676 = vadd.f32 0.0, %v1675
        %v1677 = vpop.f32.mrb[0].mxu0
        %v1678 = vpop.f32.mrb[0].mxu0
        %v1679 = vadd.f32 0.0, %v1678
        %v1680 = vpop.f32.mrb[0].mxu0
        %1681 = vmatprep.mubr.bf16.mxu0 0
        %1682 = vmatmul.mubr.bf16.gmra.mrb[0].mxu0 %v1310
        %v1683 = vpop.f32.mrb[0].mxu0
        %v1684 = vadd.f32 0.0, %v1683
        %v1685 = vpop.f32.mrb[0].mxu0
        %v1686 = vpop.f32.mrb[0].mxu0
        %v1687 = vadd.f32 0.0, %v1686
        %v1688 = vpop.f32.mrb[0].mxu0
        %1689 = vmatprep.mubr.bf16.mxu0 0
        %1690 = vmatmul.mubr.bf16.gmra.mrb[0].mxu0 %v1313
        %v1691 = vpop.f32.mrb[0].mxu0
        %v1692 = vadd.f32 0.0, %v1691
        %v1693 = vpop.f32.mrb[0].mxu0
        %v1694 = vpop.f32.mrb[0].mxu0
        %v1695 = vadd.f32 0.0, %v1694
        %v1696 = vpop.f32.mrb[0].mxu0
        %1697 = vmatprep.mubr.bf16.mxu0 0
        %1698 = vmatmul.mubr.bf16.gmra.mrb[0].mxu0 %v1543
        %v1699 = vpop.f32.mrb[0].mxu0
        %v1700 = vadd.f32 0.0, %v1699
        %v1701 = vpop.f32.mrb[0].mxu0
        %v1702 = vpop.f32.mrb[0].mxu0
        %v1703 = vadd.f32 0.0, %v1702
        %v1704 = vpop.f32.mrb[0].mxu0
        %1705 = vdwg.mxu0
        %1738 = vrot.lane.b32.xlu0 %v1580, 8
        %v1739 = vpop.permute.xlu0 %1738
        %1740 = vrot.lane.b32.xlu0 %v1583, 8
        %v1741 = vpop.permute.xlu0 %1740
        %1742 = vrot.lane.b32.xlu0 %v1588, 8
        %v1743 = vpop.permute.xlu0 %1742
        %1744 = vrot.lane.b32.xlu0 %v1591, 8
        %v1745 = vpop.permute.xlu0 %1744
        %1746 = vrot.lane.b32.xlu0 %v1596, 8
        %v1747 = vpop.permute.xlu0 %1746
        %1748 = vrot.lane.b32.xlu0 %v1599, 8
        %v1749 = vpop.permute.xlu0 %1748
        %1750 = vrot.lane.b32.xlu0 %v1604, 8
        %v1751 = vpop.permute.xlu0 %1750
        %1752 = vrot.lane.b32.xlu0 %v1607, 8
        %v1753 = vpop.permute.xlu0 %1752
        %1754 = vrot.lane.b32.xlu0 %v1612, 8
        %v1755 = vpop.permute.xlu0 %1754
        %1756 = vrot.lane.b32.xlu0 %v1615, 8
        %v1757 = vpop.permute.xlu0 %1756
        %1758 = vrot.lane.b32.xlu0 %v1620, 8
        %v1759 = vpop.permute.xlu0 %1758
        %1760 = vrot.lane.b32.xlu0 %v1623, 8
        %v1761 = vpop.permute.xlu0 %1760
        %1762 = vrot.lane.b32.xlu0 %v1628, 8
        %v1763 = vpop.permute.xlu0 %1762
        %1764 = vrot.lane.b32.xlu0 %v1631, 8
        %v1765 = vpop.permute.xlu0 %1764
        %1766 = vrot.lane.b32.xlu0 %v1636, 8
        %v1767 = vpop.permute.xlu0 %1766
        %1768 = vrot.lane.b32.xlu0 %v1639, 8
        %v1769 = vpop.permute.xlu0 %1768
        %1770 = vrot.lane.b32.xlu0 %v1644, 8
        %v1771 = vpop.permute.xlu0 %1770
        %1772 = vrot.lane.b32.xlu0 %v1647, 8
        %v1773 = vpop.permute.xlu0 %1772
        %1774 = vrot.lane.b32.xlu0 %v1652, 8
        %v1775 = vpop.permute.xlu0 %1774
        %1776 = vrot.lane.b32.xlu0 %v1655, 8
        %v1777 = vpop.permute.xlu0 %1776
        %1778 = vrot.lane.b32.xlu0 %v1660, 8
        %v1779 = vpop.permute.xlu0 %1778
        %1780 = vrot.lane.b32.xlu0 %v1663, 8
        %v1781 = vpop.permute.xlu0 %1780
        %1782 = vrot.lane.b32.xlu0 %v1668, 8
        %v1783 = vpop.permute.xlu0 %1782
        %1784 = vrot.lane.b32.xlu0 %v1671, 8
        %v1785 = vpop.permute.xlu0 %1784
        %1786 = vrot.lane.b32.xlu0 %v1676, 8
        %v1787 = vpop.permute.xlu0 %1786
        %1788 = vrot.lane.b32.xlu0 %v1679, 8
        %v1789 = vpop.permute.xlu0 %1788
        %1790 = vrot.lane.b32.xlu0 %v1684, 8
        %v1791 = vpop.permute.xlu0 %1790
        %1792 = vrot.lane.b32.xlu0 %v1687, 8
        %v1793 = vpop.permute.xlu0 %1792
        %1794 = vrot.lane.b32.xlu0 %v1692, 8
        %v1795 = vpop.permute.xlu0 %1794
        %1796 = vrot.lane.b32.xlu0 %v1695, 8
        %v1797 = vpop.permute.xlu0 %1796
        %1798 = vrot.lane.b32.xlu0 %v1700, 8
        %v1799 = vpop.permute.xlu0 %1798
        %1800 = vrot.lane.b32.xlu0 %v1703, 8
        %v1801 = vpop.permute.xlu0 %1800
        %v1834 = vsel %vm1061, %v1350, %v1739
        %v1835 = vsel %vm1061, %v1353, %v1741
        %v1836 = vsel %vm1061, %v1358, %v1743
        %v1837 = vsel %vm1061, %v1361, %v1745
        %v1838 = vsel %vm1061, %v1366, %v1747
        %v1839 = vsel %vm1061, %v1369, %v1749
        %v1840 = vsel %vm1061, %v1374, %v1751
        %v1841 = vsel %vm1061, %v1377, %v1753
        %v1842 = vsel %vm1061, %v1382, %v1755
        %v1843 = vsel %vm1061, %v1385, %v1757
        %v1844 = vsel %vm1061, %v1390, %v1759
        %v1845 = vsel %vm1061, %v1393, %v1761
        %v1846 = vsel %vm1061, %v1398, %v1763
        %v1847 = vsel %vm1061, %v1401, %v1765
        %v1848 = vsel %vm1061, %v1406, %v1767
        %v1849 = vsel %vm1061, %v1409, %v1769
        %v1850 = vsel %vm1061, %v1414, %v1771
        %v1851 = vsel %vm1061, %v1417, %v1773
        %v1852 = vsel %vm1061, %v1422, %v1775
        %v1853 = vsel %vm1061, %v1425, %v1777
        %v1854 = vsel %vm1061, %v1430, %v1779
        %v1855 = vsel %vm1061, %v1433, %v1781
        %v1856 = vsel %vm1061, %v1438, %v1783
        %v1857 = vsel %vm1061, %v1441, %v1785
        %v1858 = vsel %vm1061, %v1446, %v1787
        %v1859 = vsel %vm1061, %v1449, %v1789
        %v1860 = vsel %vm1061, %v1454, %v1791
        %v1861 = vsel %vm1061, %v1457, %v1793
        %v1862 = vsel %vm1061, %v1462, %v1795
        %v1863 = vsel %vm1061, %v1465, %v1797
        %v1864 = vsel %vm1061, %v1470, %v1799
        %v1865 = vsel %vm1061, %v1473, %v1801
        %v1866 = vsel %vm1094, %v1834, 0.0
        %v1867 = vsel %vm1094, %v1835, 0.0
        %v1868 = vadd.f32 %v1866, %v1867
        %v1869 = vsel %vm1094, %v1836, 0.0
        %v1870 = vadd.f32 %v1868, %v1869
        %v1871 = vsel %vm1094, %v1837, 0.0
        %v1872 = vadd.f32 %v1870, %v1871
        %v1873 = vsel %vm1094, %v1838, 0.0
        %v1874 = vadd.f32 %v1872, %v1873
        %v1875 = vsel %vm1094, %v1839, 0.0
        %v1876 = vadd.f32 %v1874, %v1875
        %v1877 = vsel %vm1094, %v1840, 0.0
        %v1878 = vadd.f32 %v1876, %v1877
        %v1879 = vsel %vm1094, %v1841, 0.0
        %v1880 = vadd.f32 %v1878, %v1879
        %v1881 = vsel %vm1094, %v1842, 0.0
        %v1882 = vadd.f32 %v1880, %v1881
        %v1883 = vsel %vm1094, %v1843, 0.0
        %v1884 = vadd.f32 %v1882, %v1883
        %v1885 = vsel %vm1094, %v1844, 0.0
        %v1886 = vadd.f32 %v1884, %v1885
        %v1887 = vsel %vm1094, %v1845, 0.0
        %v1888 = vadd.f32 %v1886, %v1887
        %v1889 = vsel %vm1094, %v1846, 0.0
        %v1890 = vadd.f32 %v1888, %v1889
        %v1891 = vsel %vm1094, %v1847, 0.0
        %v1892 = vadd.f32 %v1890, %v1891
        %v1893 = vsel %vm1094, %v1848, 0.0
        %v1894 = vadd.f32 %v1892, %v1893
        %v1895 = vsel %vm1094, %v1849, 0.0
        %v1896 = vadd.f32 %v1894, %v1895
        %v1897 = vsel %vm1094, %v1850, 0.0
        %v1898 = vadd.f32 %v1896, %v1897
        %v1899 = vsel %vm1094, %v1851, 0.0
        %v1900 = vadd.f32 %v1898, %v1899
        %v1901 = vsel %vm1094, %v1852, 0.0
        %v1902 = vadd.f32 %v1900, %v1901
        %v1903 = vsel %vm1094, %v1853, 0.0
        %v1904 = vadd.f32 %v1902, %v1903
        %v1905 = vsel %vm1094, %v1854, 0.0
        %v1906 = vadd.f32 %v1904, %v1905
        %v1907 = vsel %vm1094, %v1855, 0.0
        %v1908 = vadd.f32 %v1906, %v1907
        %v1909 = vsel %vm1094, %v1856, 0.0
        %v1910 = vadd.f32 %v1908, %v1909
        %v1911 = vsel %vm1094, %v1857, 0.0
        %v1912 = vadd.f32 %v1910, %v1911
        %v1913 = vsel %vm1094, %v1858, 0.0
        %v1914 = vadd.f32 %v1912, %v1913
        %v1915 = vsel %vm1094, %v1859, 0.0
        %v1916 = vadd.f32 %v1914, %v1915
        %v1917 = vsel %vm1094, %v1860, 0.0
        %v1918 = vadd.f32 %v1916, %v1917
        %v1919 = vsel %vm1094, %v1861, 0.0
        %v1920 = vadd.f32 %v1918, %v1919
        %v1921 = vsel %vm1094, %v1862, 0.0
        %v1922 = vadd.f32 %v1920, %v1921
        %v1923 = vsel %vm1094, %v1863, 0.0
        %v1924 = vadd.f32 %v1922, %v1923
        %v1925 = vsel %vm1094, %v1864, 0.0
        %v1926 = vadd.f32 %v1924, %v1925
        %v1927 = vsel %vm1094, %v1865, 0.0
        %v1928 = vadd.f32 %v1926, %v1927
        %v1929 = vrot.slane %v1928, 4
        %v1930 = vadd.f32 %v1928, %v1929
        %v1931 = vrot.slane %v1930, 2
        %v1932 = vadd.f32 %v1930, %v1931
        %v1933 = vrot.slane %v1932, 1
        %v1934 = vadd.f32 %v1932, %v1933
        %v1935 = vmul.f32 %v1834, %v1834
        %v1936 = vmul.f32 %v1835, %v1835
        %v1937 = vmul.f32 %v1836, %v1836
        %v1938 = vmul.f32 %v1837, %v1837
        %v1939 = vmul.f32 %v1838, %v1838
        %v1940 = vmul.f32 %v1839, %v1839
        %v1941 = vmul.f32 %v1840, %v1840
        %v1942 = vmul.f32 %v1841, %v1841
        %v1943 = vmul.f32 %v1842, %v1842
        %v1944 = vmul.f32 %v1843, %v1843
        %v1945 = vmul.f32 %v1844, %v1844
        %v1946 = vmul.f32 %v1845, %v1845
        %v1947 = vmul.f32 %v1846, %v1846
        %v1948 = vmul.f32 %v1847, %v1847
        %v1949 = vmul.f32 %v1848, %v1848
        %v1950 = vmul.f32 %v1849, %v1849
        %v1951 = vmul.f32 %v1850, %v1850
        %v1952 = vmul.f32 %v1851, %v1851
        %v1953 = vmul.f32 %v1852, %v1852
        %v1954 = vmul.f32 %v1853, %v1853
        %v1955 = vmul.f32 %v1854, %v1854
        %v1956 = vmul.f32 %v1855, %v1855
        %v1957 = vmul.f32 %v1856, %v1856
        %v1958 = vmul.f32 %v1857, %v1857
        %v1959 = vmul.f32 %v1858, %v1858
        %v1960 = vmul.f32 %v1859, %v1859
        %v1961 = vmul.f32 %v1860, %v1860
        %v1962 = vmul.f32 %v1861, %v1861
        %v1963 = vmul.f32 %v1862, %v1862
        %v1964 = vmul.f32 %v1863, %v1863
        %v1965 = vmul.f32 %v1864, %v1864
        %v1966 = vmul.f32 %v1865, %v1865
        %v1967 = vsel %vm1094, %v1935, 0.0
        %v1968 = vsel %vm1094, %v1936, 0.0
        %v1969 = vadd.f32 %v1967, %v1968
        %v1970 = vsel %vm1094, %v1937, 0.0
        %v1971 = vadd.f32 %v1969, %v1970
        %v1972 = vsel %vm1094, %v1938, 0.0
        %v1973 = vadd.f32 %v1971, %v1972
        %v1974 = vsel %vm1094, %v1939, 0.0
        %v1975 = vadd.f32 %v1973, %v1974
        %v1976 = vsel %vm1094, %v1940, 0.0
        %v1977 = vadd.f32 %v1975, %v1976
        %v1978 = vsel %vm1094, %v1941, 0.0
        %v1979 = vadd.f32 %v1977, %v1978
        %v1980 = vsel %vm1094, %v1942, 0.0
        %v1981 = vadd.f32 %v1979, %v1980
        %v1982 = vsel %vm1094, %v1943, 0.0
        %v1983 = vadd.f32 %v1981, %v1982
        %v1984 = vsel %vm1094, %v1944, 0.0
        %v1985 = vadd.f32 %v1983, %v1984
        %v1986 = vsel %vm1094, %v1945, 0.0
        %v1987 = vadd.f32 %v1985, %v1986
        %v1988 = vsel %vm1094, %v1946, 0.0
        %v1989 = vadd.f32 %v1987, %v1988
        %v1990 = vsel %vm1094, %v1947, 0.0
        %v1991 = vadd.f32 %v1989, %v1990
        %v1992 = vsel %vm1094, %v1948, 0.0
        %v1993 = vadd.f32 %v1991, %v1992
        %v1994 = vsel %vm1094, %v1949, 0.0
        %v1995 = vadd.f32 %v1993, %v1994
        %v1996 = vsel %vm1094, %v1950, 0.0
        %v1997 = vadd.f32 %v1995, %v1996
        %v1998 = vsel %vm1094, %v1951, 0.0
        %v1999 = vadd.f32 %v1997, %v1998
        %v2000 = vsel %vm1094, %v1952, 0.0
        %v2001 = vadd.f32 %v1999, %v2000
        %v2002 = vsel %vm1094, %v1953, 0.0
        %v2003 = vadd.f32 %v2001, %v2002
        %v2004 = vsel %vm1094, %v1954, 0.0
        %v2005 = vadd.f32 %v2003, %v2004
        %v2006 = vsel %vm1094, %v1955, 0.0
        %v2007 = vadd.f32 %v2005, %v2006
        %v2008 = vsel %vm1094, %v1956, 0.0
        %v2009 = vadd.f32 %v2007, %v2008
        %v2010 = vsel %vm1094, %v1957, 0.0
        %v2011 = vadd.f32 %v2009, %v2010
        %v2012 = vsel %vm1094, %v1958, 0.0
        %v2013 = vadd.f32 %v2011, %v2012
        %v2014 = vsel %vm1094, %v1959, 0.0
        %v2015 = vadd.f32 %v2013, %v2014
        %v2016 = vsel %vm1094, %v1960, 0.0
        %v2017 = vadd.f32 %v2015, %v2016
        %v2018 = vsel %vm1094, %v1961, 0.0
        %v2019 = vadd.f32 %v2017, %v2018
        %v2020 = vsel %vm1094, %v1962, 0.0
        %v2021 = vadd.f32 %v2019, %v2020
        %v2022 = vsel %vm1094, %v1963, 0.0
        %v2023 = vadd.f32 %v2021, %v2022
        %v2024 = vsel %vm1094, %v1964, 0.0
        %v2025 = vadd.f32 %v2023, %v2024
        %v2026 = vsel %vm1094, %v1965, 0.0
        %v2027 = vadd.f32 %v2025, %v2026
        %v2028 = vsel %vm1094, %v1966, 0.0
        %v2029 = vadd.f32 %v2027, %v2028
        %v2030 = vrot.slane %v2029, 4
        %v2031 = vadd.f32 %v2029, %v2030
        %v2032 = vrot.slane %v2031, 2
        %v2033 = vadd.f32 %v2031, %v2032
        %v2034 = vrot.slane %v2033, 1
        %v2035 = vadd.f32 %v2033, %v2034
        %2037 = vrot.lane.b32.xlu0 %v1934, 124
        %v2038 = vpop.permute.xlu0 %2037
        %v2040 = vadd.f32 %v1934, %v2038
        %2041 = vrot.lane.b32.xlu0 %v1934, 120
        %v2042 = vpop.permute.xlu0 %2041
        %v2044 = vadd.f32 %v2040, %v2042
        %2045 = vrot.lane.b32.xlu0 %v1934, 116
        %v2046 = vpop.permute.xlu0 %2045
        %v2048 = vadd.f32 %v2044, %v2046
        %2050 = vrot.lane.b32.xlu0 %v2035, 124
        %v2051 = vpop.permute.xlu0 %2050
        %v2053 = vadd.f32 %v2035, %v2051
        %2054 = vrot.lane.b32.xlu0 %v2035, 120
        %v2055 = vpop.permute.xlu0 %2054
        %v2057 = vadd.f32 %v2053, %v2055
        %2058 = vrot.lane.b32.xlu0 %v2035, 116
        %v2059 = vpop.permute.xlu0 %2058
        %v2061 = vadd.f32 %v2057, %v2059
        %v2062 = vmul.f32 %v2048, 0.0009765625
        %v2063 = vmul.f32 %v2061, 0.0009765625
        %v2064 = vmul.f32 %v2062, %v2062
        %v2065 = vsub.f32 %v2063, %v2064
        %v2066 = vadd.f32 %v2065, 1e-05
        %v2067 = vrsqrt.pop %v2066
        %2069 = vrot.lane.b32.xlu0 %v2062, 4
        %v2070 = vpop.permute.xlu0 %2069
        %2072 = vrot.lane.b32.xlu0 %v2062, 8
        %v2073 = vpop.permute.xlu0 %2072
        %2075 = vrot.lane.b32.xlu0 %v2062, 12
        %v2076 = vpop.permute.xlu0 %2075
        %vm2078 = vcmask 31744
        %v2079 = vsel %vm2078, %v2062, %v2070
        %v2080 = vsel %vm1061, %v2079, %v2073
        %vm2081 = vcmask 97280
        %v2082 = vsel %vm2081, %v2080, %v2076
        %2084 = vrot.lane.b32.xlu0 %v2067, 4
        %v2085 = vpop.permute.xlu0 %2084
        %2087 = vrot.lane.b32.xlu0 %v2067, 8
        %v2088 = vpop.permute.xlu0 %2087
        %2090 = vrot.lane.b32.xlu0 %v2067, 12
        %v2091 = vpop.permute.xlu0 %2090
        %v2093 = vsel %vm2078, %v2067, %v2085
        %v2094 = vsel %vm1061, %v2093, %v2088
        %v2095 = vsel %vm2081, %v2094, %v2091
        %v2096 = vlaneseq
        %v2097 = vshrl.u32 %v2096, 7
        %v2098 = vsub.s32 0, %v2097
        %v2099 = vrot.slane %v2082, %v2098
        %v2100 = vsub.f32 %v1834, %v2099
        %v2101 = vsub.f32 %v1835, %v2099
        %v2102 = vsub.f32 %v1836, %v2099
        %v2103 = vsub.f32 %v1837, %v2099
        %v2104 = vsub.f32 %v1838, %v2099
        %v2105 = vsub.f32 %v1839, %v2099
        %v2106 = vsub.f32 %v1840, %v2099
        %v2107 = vsub.f32 %v1841, %v2099
        %v2108 = vsub.f32 %v1842, %v2099
        %v2109 = vsub.f32 %v1843, %v2099
        %v2110 = vsub.f32 %v1844, %v2099
        %v2111 = vsub.f32 %v1845, %v2099
        %v2112 = vsub.f32 %v1846, %v2099
        %v2113 = vsub.f32 %v1847, %v2099
        %v2114 = vsub.f32 %v1848, %v2099
        %v2115 = vsub.f32 %v1849, %v2099
        %v2116 = vsub.f32 %v1850, %v2099
        %v2117 = vsub.f32 %v1851, %v2099
        %v2118 = vsub.f32 %v1852, %v2099
        %v2119 = vsub.f32 %v1853, %v2099
        %v2120 = vsub.f32 %v1854, %v2099
        %v2121 = vsub.f32 %v1855, %v2099
        %v2122 = vsub.f32 %v1856, %v2099
        %v2123 = vsub.f32 %v1857, %v2099
        %v2124 = vsub.f32 %v1858, %v2099
        %v2125 = vsub.f32 %v1859, %v2099
        %v2126 = vsub.f32 %v1860, %v2099
        %v2127 = vsub.f32 %v1861, %v2099
        %v2128 = vsub.f32 %v1862, %v2099
        %v2129 = vsub.f32 %v1863, %v2099
        %v2130 = vsub.f32 %v1864, %v2099
        %v2131 = vsub.f32 %v1865, %v2099
        %v2132 = vlaneseq
        %v2133 = vshrl.u32 %v2132, 7
        %v2134 = vsub.s32 0, %v2133
        %v2135 = vrot.slane %v2095, %v2134
        %v2136 = vmul.f32 %v2100, %v2135
        %v2137 = vmul.f32 %v2101, %v2135
        %v2138 = vmul.f32 %v2102, %v2135
        %v2139 = vmul.f32 %v2103, %v2135
        %v2140 = vmul.f32 %v2104, %v2135
        %v2141 = vmul.f32 %v2105, %v2135
        %v2142 = vmul.f32 %v2106, %v2135
        %v2143 = vmul.f32 %v2107, %v2135
        %v2144 = vmul.f32 %v2108, %v2135
        %v2145 = vmul.f32 %v2109, %v2135
        %v2146 = vmul.f32 %v2110, %v2135
        %v2147 = vmul.f32 %v2111, %v2135
        %v2148 = vmul.f32 %v2112, %v2135
        %v2149 = vmul.f32 %v2113, %v2135
        %v2150 = vmul.f32 %v2114, %v2135
        %v2151 = vmul.f32 %v2115, %v2135
        %v2152 = vmul.f32 %v2116, %v2135
        %v2153 = vmul.f32 %v2117, %v2135
        %v2154 = vmul.f32 %v2118, %v2135
        %v2155 = vmul.f32 %v2119, %v2135
        %v2156 = vmul.f32 %v2120, %v2135
        %v2157 = vmul.f32 %v2121, %v2135
        %v2158 = vmul.f32 %v2122, %v2135
        %v2159 = vmul.f32 %v2123, %v2135
        %v2160 = vmul.f32 %v2124, %v2135
        %v2161 = vmul.f32 %v2125, %v2135
        %v2162 = vmul.f32 %v2126, %v2135
        %v2163 = vmul.f32 %v2127, %v2135
        %v2164 = vmul.f32 %v2128, %v2135
        %v2165 = vmul.f32 %v2129, %v2135
        %v2166 = vmul.f32 %v2130, %v2135
        %v2167 = vmul.f32 %v2131, %v2135
        %2168 = vst.msk [vmem:[%s136] sm:$0xff] %vm1094, %v2136
        %2169 = vst.msk [vmem:[%s136 + $0x8] sm:$0xff] %vm1094, %v2137
        %2170 = vst.msk [vmem:[%s136 + $0x10] sm:$0xff] %vm1094, %v2138
        %2171 = vst.msk [vmem:[%s136 + $0x18] sm:$0xff] %vm1094, %v2139
        %2172 = vst.msk [vmem:[%s136 + $0x20] sm:$0xff] %vm1094, %v2140
        %2173 = vst.msk [vmem:[%s136 + $0x28] sm:$0xff] %vm1094, %v2141
        %2174 = vst.msk [vmem:[%s136 + $0x30] sm:$0xff] %vm1094, %v2142
        %2175 = vst.msk [vmem:[%s136 + $0x38] sm:$0xff] %vm1094, %v2143
        %2176 = vst.msk [vmem:[%s136 + $0x40] sm:$0xff] %vm1094, %v2144
        %2177 = vst.msk [vmem:[%s136 + $0x48] sm:$0xff] %vm1094, %v2145
        %2178 = vst.msk [vmem:[%s136 + $0x50] sm:$0xff] %vm1094, %v2146
        %2179 = vst.msk [vmem:[%s136 + $0x58] sm:$0xff] %vm1094, %v2147
        %2180 = vst.msk [vmem:[%s136 + $0x60] sm:$0xff] %vm1094, %v2148
        %2181 = vst.msk [vmem:[%s136 + $0x68] sm:$0xff] %vm1094, %v2149
        %2182 = vst.msk [vmem:[%s136 + $0x70] sm:$0xff] %vm1094, %v2150
        %2183 = vst.msk [vmem:[%s136 + $0x78] sm:$0xff] %vm1094, %v2151
        %2184 = vst.msk [vmem:[%s136 + $0x80] sm:$0xff] %vm1094, %v2152
        %2185 = vst.msk [vmem:[%s136 + $0x88] sm:$0xff] %vm1094, %v2153
        %2186 = vst.msk [vmem:[%s136 + $0x90] sm:$0xff] %vm1094, %v2154
        %2187 = vst.msk [vmem:[%s136 + $0x98] sm:$0xff] %vm1094, %v2155
        %2188 = vst.msk [vmem:[%s136 + $0xa0] sm:$0xff] %vm1094, %v2156
        %2189 = vst.msk [vmem:[%s136 + $0xa8] sm:$0xff] %vm1094, %v2157
        %2190 = vst.msk [vmem:[%s136 + $0xb0] sm:$0xff] %vm1094, %v2158
        %2191 = vst.msk [vmem:[%s136 + $0xb8] sm:$0xff] %vm1094, %v2159
        %2192 = vst.msk [vmem:[%s136 + $0xc0] sm:$0xff] %vm1094, %v2160
        %2193 = vst.msk [vmem:[%s136 + $0xc8] sm:$0xff] %vm1094, %v2161
        %2194 = vst.msk [vmem:[%s136 + $0xd0] sm:$0xff] %vm1094, %v2162
        %2195 = vst.msk [vmem:[%s136 + $0xd8] sm:$0xff] %vm1094, %v2163
        %2196 = vst.msk [vmem:[%s136 + $0xe0] sm:$0xff] %vm1094, %v2164
        %2197 = vst.msk [vmem:[%s136 + $0xe8] sm:$0xff] %vm1094, %v2165
        %2198 = vst.msk [vmem:[%s136 + $0xf0] sm:$0xff] %vm1094, %v2166
        %2199 = vst.msk [vmem:[%s136 + $0xf8] sm:$0xff] %vm1094, %v2167
        %s2200 = sand.u32 %s71, 1
        %s2201 = scalar_lea.sflag [#allocation3], %s2200
        %s2202 = sand.u32 %s71, 1
        %s2203 = smul.addr %s2202, 256
        %s2204 = scalar_lea.vmem [#allocation2], %s2203
        // Predicated region
        $region29: #{tpu_custom_call.1} parent=27 // pred_check
          %p2205 = pneg %p81
        $region30: #{tpu_custom_call.1} parent=27 // pred_check_branch
          %2207 = sbr.rel (%p2205) target = $region32
        $region31: #{tpu_custom_call.1} parent=27 // pred_region
          %s2209 = ssub.s32 4096, 4096
          %2210 = vsyncadd %s2201, %s2209
          %s2211 = smul.addr %s16, 32
          %s2212 = smul.addr %s2211, 128
          %s2213 = scalar_lea.hbm %s2, %s2212
          %s2214 = sshll.u32 %s2204, 4
          %s2215 = int_to_ptr.vmem [resolvable:$true] %s2214
          %2220 = dma.vmem_to_hbm [thread:$0]  %s2215, 4096, %s2213, %s2201, 128, 128, 8
        $region32: #{tpu_custom_call.1} parent=27 // pred_fallthru
          _
      $region28: #{tpu_custom_call.1} parent=5 // pred_fallthru
        _
      %p2221 = scmp.le.s32.totalorder 2, %s11
      // Predicated region
      $region33: #{tpu_custom_call.1} parent=5 // pred_check
        %p2222 = pneg %p2221
      $region34: #{tpu_custom_call.1} parent=5 // pred_check_branch
        %2224 = sbr.rel (%p2222) target = $region36
      $region35: #{tpu_custom_call.1} parent=5 // pred_region
        %s2225 = ssub.s32 %s11, 2
        // Predicated region
        $region37: #{tpu_custom_call.1} parent=35 // pred_check
          %p2226 = pneg %p87
        $region38: #{tpu_custom_call.1} parent=35 // pred_check_branch
          %2228 = sbr.rel (%p2226) target = $region40
        $region39: #{tpu_custom_call.1} parent=35 // pred_region
          %s2229 = sand.u32 %s72, 1
          %s2230 = scalar_lea.sflag [#allocation3], %s2229
          %s2231 = sand.u32 %s72, 1
          %s2232 = smul.addr %s2231, 256
          %s2233 = scalar_lea.vmem [#allocation2], %s2232
          %2234 = dma.done %s2230, 4096
        $region40: #{tpu_custom_call.1} parent=35 // pred_fallthru
          _
      $region36: #{tpu_custom_call.1} parent=5 // pred_fallthru
        _
    $region6: #{tpu_custom_call.1} parent=1 // loop_footer
      %s15 = sadd.s32 1, %s11
    $region7: #{tpu_custom_call.1} parent=1 // loop_footer_branch
      %10 = sbr.rel target = $region3
    $region8: #{tpu_custom_call.1} parent=1 // loop_exit
      _
    %2235 = vsyncpa [#allocation3], 1
    %s2236 = scalar_lea.sflag [#allocation3], 1
    %2237 = vsyncpa %s2236, 1

</llo_original>
